<compile_context>
chip_gen: v6e
topology: v6e:2x2x1
jax: 0.10.0
libtpu: 0.0.40
codegen_flags: <defaults>
</compile_context>

<pallas_src>
import jax
import jax.numpy as jnp
from jax.experimental import pallas as pl
from jax.experimental.pallas import tpu as pltpu


# --------------------------- static network dims --------------------------- #
N = 2                            # batch
C0, H0, W0 = 4, 16, 16           # input (NCHW at the module boundary)
K, S = 3, 2                      # conv kernel size / stride
C1, OH1, OW1 = 8, 7, 7           # conv1 output
C2, OH2, OW2 = 16, 3, 3          # conv2 output
FC1, FC2 = 32, 8

P0 = C0 * H0 * W0                # 1024  flattened input per image (NCHW order)
Q1 = C1 * OH1 * OW1              # 392   flattened conv1 output per image
Q2 = C2 * OH2 * OW2              # 144   flattened conv2 output per image
FLAT = N * Q2                    # 288   Flatten(start_dim=0) mixes batch in
Q1P = 512                        # Q1 padded to a multiple of 128 lanes
Q2P = 256                        # Q2 padded to a multiple of 128 lanes


# ------------------------------ fused kernel ------------------------------- #

def _fused_cnn_kernel(x_ref, w1_ref, w2_ref, wfa_ref, wfb_ref, b_ref, o_ref):
    """Whole forward on VMEM-resident data: 4 MXU dots, 2 bias+ReLU, 1 add.

    x_ref  : (N, P0)     input, NCHW-flattened per image
    w1_ref : (P0, Q1P)   conv1 as a dense matrix (cols >= Q1 are zero)
    w2_ref : (Q1P, Q2P)  conv2 as a dense matrix (rows >= Q1 / cols >= Q2 zero)
    wfa_ref: (Q2P, FC2)  folded fc1@fc2 weight rows for batch element 0
    wfb_ref: (Q2P, FC2)  folded fc1@fc2 weight rows for batch element 1
    b_ref  : (3, Q1P)    row0 = conv1 bias (per flat output), row1 = conv2 bias,
                         row2 = folded fc bias (all lane-0-aligned, zero padded)
    o_ref  : (1, FC2)    output
    """
    x = x_ref[...]                                            # (2, 1024)
    b = b_ref[...]                                            # (3, 512)

    # conv1 + ReLU : one lane-aligned MXU dot.  Lanes >= Q1 are exact zeros.
    y1 = jnp.maximum(
        jnp.dot(x, w1_ref[...], preferred_element_type=jnp.float32) + b[0:1, :],
        0.0)                                                  # (2, 512)

    # conv2 + ReLU : one lane-aligned MXU dot.  Lanes >= Q2 are exact zeros.
    y2 = jnp.maximum(
        jnp.dot(y1, w2_ref[...], preferred_element_type=jnp.float32)
        + b[1:2, 0:Q2P],
        0.0)                                                  # (2, 256)

    # Flatten(start_dim=0) mixes batch:  out = y2[0] @ Wf[:Q2] + y2[1] @ Wf[Q2:] + bf
    # (fc1 and fc2 are folded offline; no nonlinearity between them in this config)
    o_ref[...] = (
        jnp.dot(y2[0:1, :], wfa_ref[...], preferred_element_type=jnp.float32)
        + jnp.dot(y2[1:2, :], wfb_ref[...], preferred_element_type=jnp.float32)
        + b[2:3, 0:FC2])                                      # (1, 8)


# --------------------- offline parameter re-layout ------------------------- #

def prepare_kernel_params(params):
    """One-time offline re-layout: convs -> exact dense matrices, fc1·fc2 folded."""
    f32 = jnp.float32
    w1 = params["w1"].astype(f32)      # (C1, C0, K, K)  OIHW
    b1 = params["b1"].astype(f32)
    w2 = params["w2"].astype(f32)      # (C2, C1, K, K)
    b2 = params["b2"].astype(f32)
    wfc1 = params["wfc1"].astype(f32)  # (FC1, FLAT)
    bfc1 = params["bfc1"].astype(f32)
    wfc2 = params["wfc2"].astype(f32)  # (FC2, FC1)
    bfc2 = params["bfc2"].astype(f32)

    dn = ("NCHW", "OIHW", "NCHW")
    # conv layer k as a dense matrix: apply the (bias-free) conv to identity inputs.
    eye1 = jnp.eye(P0, dtype=f32).reshape(P0, C0, H0, W0)
    w1big = jax.lax.conv_general_dilated(
        eye1, w1, (S, S), "VALID", dimension_numbers=dn).reshape(P0, Q1)
    eye2 = jnp.eye(Q1, dtype=f32).reshape(Q1, C1, OH1, OW1)
    w2big = jax.lax.conv_general_dilated(
        eye2, w2, (S, S), "VALID", dimension_numbers=dn).reshape(Q1, Q2)

    # fold fc1 -> fc2 (no nonlinearity between them in the CarRacing branch)
    wf = wfc1.T @ wfc2.T                          # (FLAT, FC2) = (288, 8)
    bf = bfc1 @ wfc2.T + bfc2                     # (FC2,)

    # per-flat-output biases for the conv layers (NCHW-flat order: channel-major)
    b1big = jnp.repeat(b1, OH1 * OW1)             # (Q1,)
    b2big = jnp.repeat(b2, OH2 * OW2)             # (Q2,)

    # zero-pad everything to lane-aligned widths (multiples of 128)
    w1p = jnp.zeros((P0, Q1P), f32).at[:, :Q1].set(w1big)
    w2p = jnp.zeros((Q1P, Q2P), f32).at[:Q1, :Q2].set(w2big)
    wfa = jnp.zeros((Q2P, FC2), f32).at[:Q2, :].set(wf[:Q2])
    wfb = jnp.zeros((Q2P, FC2), f32).at[:Q2, :].set(wf[Q2:])
    b_pack = (jnp.zeros((3, Q1P), f32)
              .at[0, :Q1].set(b1big)
              .at[1, :Q2].set(b2big)
              .at[2, :FC2].set(bf))
    return dict(w1p=w1p, w2p=w2p, wfa=wfa, wfb=wfb, b_pack=b_pack)


# ------------------------------- forward ----------------------------------- #

@jax.jit
def cnn_forward(x, kp):
    """x: (N, C0, H0, W0) NCHW float32 -> (FC2,) output."""
    x2 = x.reshape(N, P0).astype(jnp.float32)     # NCHW flatten per image (free)
    vmem = pl.BlockSpec(memory_space=pltpu.MemorySpace.VMEM)
    out = pl.pallas_call(
        _fused_cnn_kernel,
        out_shape=jax.ShapeDtypeStruct((1, FC2), jnp.float32),
        in_specs=[vmem, vmem, vmem, vmem, vmem, vmem],
        out_specs=vmem,
    )(x2, kp["w1p"], kp["w2p"], kp["wfa"], kp["wfb"], kp["b_pack"])
    return out.reshape(-1)


# ------------------------------ parameter init ----------------------------- #

def _xavier_uniform(key, shape, fan_in, fan_out):
    bound = (6.0 / (fan_in + fan_out)) ** 0.5
    return jax.random.uniform(key, shape, jnp.float32, -bound, bound)


def _bias_init(key, shape, fan_in):
    bound = 1.0 / (fan_in ** 0.5)
    return jax.random.uniform(key, shape, jnp.float32, -bound, bound)


def make_params(key):
    ks = jax.random.split(key, 8)
    w1 = _xavier_uniform(ks[0], (C1, C0, K, K), fan_in=C0 * K * K, fan_out=C1 * K * K)
    b1 = _bias_init(ks[1], (C1,), fan_in=C0 * K * K)
    w2 = _xavier_uniform(ks[2], (C2, C1, K, K), fan_in=C1 * K * K, fan_out=C2 * K * K)
    b2 = _bias_init(ks[3], (C2,), fan_in=C1 * K * K)
    wfc1 = _xavier_uniform(ks[4], (FC1, FLAT), fan_in=FLAT, fan_out=FC1)
    bfc1 = _bias_init(ks[5], (FC1,), fan_in=FLAT)
    wfc2 = _xavier_uniform(ks[6], (FC2, FC1), fan_in=FC1, fan_out=FC2)
    bfc2 = _bias_init(ks[7], (FC2,), fan_in=FC1)
    return dict(w1=w1, b1=b1, w2=w2, b2=b2,
                wfc1=wfc1, bfc1=bfc1, wfc2=wfc2, bfc2=bfc2)


# --------------------------- pure-JAX reference ----------------------------- #

def reference_forward(x, params):
    dn = ("NCHW", "OIHW", "NCHW")
    y = jax.lax.conv_general_dilated(x, params["w1"], (S, S), "VALID",
                                     dimension_numbers=dn)
    y = jnp.maximum(y + params["b1"][None, :, None, None], 0.0)
    y = jax.lax.conv_general_dilated(y, params["w2"], (S, S), "VALID",
                                     dimension_numbers=dn)
    y = jnp.maximum(y + params["b2"][None, :, None, None], 0.0)
    flat = y.reshape(-1)                          # PyTorch Flatten(start_dim=0)
    h = flat @ params["wfc1"].T + params["bfc1"]
    return h @ params["wfc2"].T + params["bfc2"]


# ----------------------------------- main ----------------------------------- #

if __name__ == "__main__":
    key = jax.random.PRNGKey(0)
    k_param, k_x = jax.random.split(key)
    params = make_params(k_param)
    kp = prepare_kernel_params(params)            # one-time offline weight re-layout
    x = jax.random.normal(k_x, (N, C0, H0, W0), jnp.float32)   # NCHW input

    out = jax.block_until_ready(cnn_forward(x, kp))
    ref = jax.block_until_ready(reference_forward(x, params))

    assert out.shape == (FC2,), out.shape
    assert bool(jnp.all(jnp.isfinite(out)))
    assert jnp.allclose(out, ref, rtol=1e-2, atol=1e-2), (out, ref)

    print("KERNEL_OK")
</pallas_src>

<mosaic_0001>
module attributes {stable_mosaic.version = 11 : i64} {
  func.func @_fused_cnn_kernel(%arg0: memref<2x1024xf32, #tpu.memory_space<vmem>>, %arg1: memref<1024x512xf32, #tpu.memory_space<vmem>>, %arg2: memref<512x256xf32, #tpu.memory_space<vmem>>, %arg3: memref<256x8xf32, #tpu.memory_space<vmem>>, %arg4: memref<256x8xf32, #tpu.memory_space<vmem>>, %arg5: memref<3x512xf32, #tpu.memory_space<vmem>>, %arg6: memref<1x8xf32, #tpu.memory_space<vmem>>) attributes {dimension_semantics = [], scalar_prefetch = 0 : i64, scratch_operands = 0 : i64, tpu.core_type = #tpu.core_type<tc>} {
    %c0 = arith.constant 0 : index
    %c0_0 = arith.constant 0 : index
    %0 = vector.load %arg0[%c0, %c0_0] : memref<2x1024xf32, #tpu.memory_space<vmem>>, vector<2x1024xf32>
    %c0_1 = arith.constant 0 : index
    %c0_2 = arith.constant 0 : index
    %1 = vector.load %arg5[%c0_1, %c0_2] : memref<3x512xf32, #tpu.memory_space<vmem>>, vector<3x512xf32>
    %c0_3 = arith.constant 0 : index
    %c0_4 = arith.constant 0 : index
    %2 = vector.load %arg1[%c0_3, %c0_4] : memref<1024x512xf32, #tpu.memory_space<vmem>>, vector<1024x512xf32>
    %cst = arith.constant dense<0.000000e+00> : vector<2x512xf32>
    %3 = tpu.matmul %0, %2, %cst {dimension_numbers = #tpu.dot_dimension_numbers<[1], [0], [0], [1], [0, 0, 1, 1], [], []>} : vector<2x1024xf32>, vector<1024x512xf32>, vector<2x512xf32> -> vector<2x512xf32>
    %4 = vector.extract_strided_slice %1 {offsets = [0, 0], sizes = [1, 512], strides = [1, 1]} : vector<3x512xf32> to vector<1x512xf32>
    %5 = vector.broadcast %4 : vector<1x512xf32> to vector<2x512xf32>
    %6 = arith.addf %3, %5 : vector<2x512xf32>
    %cst_5 = arith.constant 0.000000e+00 : f32
    %7 = vector.broadcast %cst_5 : f32 to vector<2x512xf32>
    %8 = arith.maximumf %6, %7 : vector<2x512xf32>
    %c0_6 = arith.constant 0 : index
    %c0_7 = arith.constant 0 : index
    %9 = vector.load %arg2[%c0_6, %c0_7] : memref<512x256xf32, #tpu.memory_space<vmem>>, vector<512x256xf32>
    %cst_8 = arith.constant dense<0.000000e+00> : vector<2x256xf32>
    %10 = tpu.matmul %8, %9, %cst_8 {dimension_numbers = #tpu.dot_dimension_numbers<[1], [0], [0], [1], [0, 0, 1, 1], [], []>} : vector<2x512xf32>, vector<512x256xf32>, vector<2x256xf32> -> vector<2x256xf32>
    %11 = vector.extract_strided_slice %1 {offsets = [1, 0], sizes = [1, 256], strides = [1, 1]} : vector<3x512xf32> to vector<1x256xf32>
    %12 = vector.broadcast %11 : vector<1x256xf32> to vector<2x256xf32>
    %13 = arith.addf %10, %12 : vector<2x256xf32>
    %cst_9 = arith.constant 0.000000e+00 : f32
    %14 = vector.broadcast %cst_9 : f32 to vector<2x256xf32>
    %15 = arith.maximumf %13, %14 : vector<2x256xf32>
    %16 = vector.extract_strided_slice %15 {offsets = [0, 0], sizes = [1, 256], strides = [1, 1]} : vector<2x256xf32> to vector<1x256xf32>
    %c0_10 = arith.constant 0 : index
    %c0_11 = arith.constant 0 : index
    %17 = vector.load %arg3[%c0_10, %c0_11] : memref<256x8xf32, #tpu.memory_space<vmem>>, vector<256x8xf32>
    %cst_12 = arith.constant dense<0.000000e+00> : vector<1x8xf32>
    %18 = tpu.matmul %16, %17, %cst_12 {dimension_numbers = #tpu.dot_dimension_numbers<[1], [0], [0], [1], [0, 0, 1, 1], [], []>} : vector<1x256xf32>, vector<256x8xf32>, vector<1x8xf32> -> vector<1x8xf32>
    %19 = vector.extract_strided_slice %15 {offsets = [1, 0], sizes = [1, 256], strides = [1, 1]} : vector<2x256xf32> to vector<1x256xf32>
    %c0_13 = arith.constant 0 : index
    %c0_14 = arith.constant 0 : index
    %20 = vector.load %arg4[%c0_13, %c0_14] : memref<256x8xf32, #tpu.memory_space<vmem>>, vector<256x8xf32>
    %cst_15 = arith.constant dense<0.000000e+00> : vector<1x8xf32>
    %21 = tpu.matmul %19, %20, %cst_15 {dimension_numbers = #tpu.dot_dimension_numbers<[1], [0], [0], [1], [0, 0, 1, 1], [], []>} : vector<1x256xf32>, vector<256x8xf32>, vector<1x8xf32> -> vector<1x8xf32>
    %22 = arith.addf %18, %21 : vector<1x8xf32>
    %23 = vector.extract_strided_slice %1 {offsets = [2, 0], sizes = [1, 8], strides = [1, 1]} : vector<3x512xf32> to vector<1x8xf32>
    %24 = arith.addf %22, %23 : vector<1x8xf32>
    %c0_16 = arith.constant 0 : index
    %c0_17 = arith.constant 0 : index
    %25 = vector.load %arg6[%c0_16, %c0_17] : memref<1x8xf32, #tpu.memory_space<vmem>>, vector<1x8xf32>
    tpu.vector_store %arg6[%c0_16, %c0_17], %24 {strides = array<i32>} : memref<1x8xf32, #tpu.memory_space<vmem>>, vector<1x8xf32>,
    return
  }
}

</mosaic_0001>

<llo_original>
// kernel: cnn_forward.1
$region0: #{cnn_forward.1}
  #allocation0 [shape = 'u32[]', space=smem, size = 0x4, offset = 0x4, fixed_abs, tag = 'smem constant byte address 0x4 - core index']
  #allocation1 [shape = 'u32[144,128]{1,0:T(1,128)}', space=vmem, size = 0x12000, scoped, tag = 'internal scratch']
  %s0 = inlined_call_operand.vmem [shape: f32[2,1024], index: 0, kind: input, shape index: {}]
  %s1 = inlined_call_operand.hbm [shape: f32[1024,512], index: 1, kind: input, shape index: {}]
  %s2 = inlined_call_operand.hbm [shape: f32[512,256], index: 2, kind: input, shape index: {}]
  %s3 = inlined_call_operand.vmem [shape: f32[256,8], index: 3, kind: input, shape index: {}]
  %s4 = inlined_call_operand.vmem [shape: f32[256,8], index: 4, kind: input, shape index: {}]
  %s5 = inlined_call_operand.hbm [shape: f32[3,512], index: 5, kind: input, shape index: {}]
  %s6 = inlined_call_operand.hbm [shape: f32[1,8], index: 6, kind: output, shape index: {}]
  %s7 = sld [smem:[#allocation0]]
  $region46: #{cnn_forward.1} parent=0
    _
  %s9 = ssub.s32 1, %s7
  %s10 = scalar_select 0, %s9, %s7
  $region1: #{cnn_forward.1} parent=0
    #allocation2 [shape = 'u8[2097152]{0}', space=vmem, size = 0x200000, scoped, tag = 'input window, operand 1, single buffered']
    #allocation3 [shape = 's32[1]{0}', space=sflag, size = 0x4, scoped, tag = 'scoped memory for cnn_forward.1']
    #allocation4 [shape = 's32[1]{0}', space=sflag, size = 0x4, scoped, tag = 'scoped memory for cnn_forward.1']
    #allocation5 [shape = 'u8[524288]{0}', space=vmem, size = 0x80000, scoped, tag = 'input window, operand 2, single buffered']
    #allocation6 [shape = 's32[1]{0}', space=sflag, size = 0x4, scoped, tag = 'scoped memory for cnn_forward.1']
    #allocation7 [shape = 'u8[8192]{0}', space=vmem, size = 0x2000, scoped, tag = 'input window, operand 5, single buffered']
    #allocation8 [shape = 'u8[512]{0}', space=vmem, size = 0x400, scoped, tag = 'output window, operand 0, single buffered']
    %11 = vsyncpa [#allocation3], 0
    %12 = vsyncpa [#allocation6], 0
    %13 = vsyncpa [#allocation4], 0
    // Predicated region
    $region2: #{cnn_forward.1} parent=1 // pred_check
      _
    $region3: #{cnn_forward.1} parent=1 // pred_check_branch
      %15 = sbr.rel (0) target = $region5
    $region4: #{cnn_forward.1} parent=1 // pred_region
      _
    $region5: #{cnn_forward.1} parent=1 // pred_fallthru
      _
    // Predicated region
    $region6: #{cnn_forward.1} parent=1 // pred_check
      _
    $region7: #{cnn_forward.1} parent=1 // pred_check_branch
      %17 = sbr.rel (0) target = $region9
    $region8: #{cnn_forward.1} parent=1 // pred_region
      %s19 = ssub.s32 65536, 65536
      %20 = vsyncadd [#allocation3], %s19
      %s21 = sshll.u32 [#allocation2], 4
      %s22 = int_to_ptr.vmem [resolvable:$true] %s21
      %27 = dma.hbm_to_vmem [thread:$0]  %s1, 65536, %s22, [#allocation3], 512, 512, 32
    $region9: #{cnn_forward.1} parent=1 // pred_fallthru
      _
    // Predicated region
    $region10: #{cnn_forward.1} parent=1 // pred_check
      _
    $region11: #{cnn_forward.1} parent=1 // pred_check_branch
      %29 = sbr.rel (0) target = $region13
    $region12: #{cnn_forward.1} parent=1 // pred_region
      %s31 = ssub.s32 16384, 16384
      %32 = vsyncadd [#allocation6], %s31
      %s33 = sshll.u32 [#allocation5], 4
      %s34 = int_to_ptr.vmem [resolvable:$true] %s33
      %39 = dma.hbm_to_vmem [thread:$0]  %s2, 16384, %s34, [#allocation6], 256, 256, 16
    $region13: #{cnn_forward.1} parent=1 // pred_fallthru
      _
    // Predicated region
    $region14: #{cnn_forward.1} parent=1 // pred_check
      _
    $region15: #{cnn_forward.1} parent=1 // pred_check_branch
      %41 = sbr.rel (0) target = $region17
    $region16: #{cnn_forward.1} parent=1 // pred_region
      _
    $region17: #{cnn_forward.1} parent=1 // pred_fallthru
      _
    // Predicated region
    $region18: #{cnn_forward.1} parent=1 // pred_check
      _
    $region19: #{cnn_forward.1} parent=1 // pred_check_branch
      %43 = sbr.rel (0) target = $region21
    $region20: #{cnn_forward.1} parent=1 // pred_region
      _
    $region21: #{cnn_forward.1} parent=1 // pred_fallthru
      _
    // Predicated region
    $region22: #{cnn_forward.1} parent=1 // pred_check
      _
    $region23: #{cnn_forward.1} parent=1 // pred_check_branch
      %45 = sbr.rel (0) target = $region25
    $region24: #{cnn_forward.1} parent=1 // pred_region
      %s47 = ssub.s32 256, 256
      %48 = vsyncadd [#allocation6], %s47
      %s50 = sshll.u32 [#allocation7], 4
      %s51 = int_to_ptr.vmem [resolvable:$true] %s50
      %53 = dma.hbm_to_vmem [thread:$0]  %s5, 256, %s51, [#allocation6]
    $region25: #{cnn_forward.1} parent=1 // pred_fallthru
      _
    // Predicated region
    $region26: #{cnn_forward.1} parent=1 // pred_check
      _
    $region27: #{cnn_forward.1} parent=1 // pred_check_branch
      %55 = sbr.rel (0) target = $region29
    $region28: #{cnn_forward.1} parent=1 // pred_region
      %56 = dma.done [#allocation3], 65536
    $region29: #{cnn_forward.1} parent=1 // pred_fallthru
      _
    // Predicated region
    $region30: #{cnn_forward.1} parent=1 // pred_check
      _
    $region31: #{cnn_forward.1} parent=1 // pred_check_branch
      %58 = sbr.rel (0) target = $region33
    $region32: #{cnn_forward.1} parent=1 // pred_region
      %59 = dma.done [#allocation6], 16384
    $region33: #{cnn_forward.1} parent=1 // pred_fallthru
      _
    // Predicated region
    $region34: #{cnn_forward.1} parent=1 // pred_check
      _
    $region35: #{cnn_forward.1} parent=1 // pred_check_branch
      %61 = sbr.rel (0) target = $region37
    $region36: #{cnn_forward.1} parent=1 // pred_region
      %62 = dma.done [#allocation6], 256
    $region37: #{cnn_forward.1} parent=1 // pred_fallthru
      _
    %v63 = vld [vmem:[%s0] sm:$0xff]
    %v64 = vld [vmem:[%s0 + $0x8] sm:$0xff]
    %v65 = vld [vmem:[#allocation7] sm:$0x77]
    %v66 = vld [vmem:[#allocation7 + $0x8] sm:$0x77]
    %v67 = vld [vmem:[#allocation2] sm:$0xff]
    %v68 = vld [vmem:[#allocation2 + $0x8] sm:$0xff]
    %v69 = vld [vmem:[#allocation2 + $0x10] sm:$0xff]
    %v70 = vld [vmem:[#allocation2 + $0x18] sm:$0xff]
    %v71 = vld [vmem:[#allocation2 + $0x20] sm:$0xff]
    %v72 = vld [vmem:[#allocation2 + $0x28] sm:$0xff]
    %v73 = vld [vmem:[#allocation2 + $0x30] sm:$0xff]
    %v74 = vld [vmem:[#allocation2 + $0x38] sm:$0xff]
    %v75 = vld [vmem:[#allocation2 + $0x40] sm:$0xff]
    %v76 = vld [vmem:[#allocation2 + $0x48] sm:$0xff]
    %v77 = vld [vmem:[#allocation2 + $0x50] sm:$0xff]
    %v78 = vld [vmem:[#allocation2 + $0x58] sm:$0xff]
    %v79 = vld [vmem:[#allocation2 + $0x60] sm:$0xff]
    %v80 = vld [vmem:[#allocation2 + $0x68] sm:$0xff]
    %v81 = vld [vmem:[#allocation2 + $0x70] sm:$0xff]
    %v82 = vld [vmem:[#allocation2 + $0x78] sm:$0xff]
    %v83 = vld [vmem:[#allocation2 + $0x80] sm:$0xff]
    %v84 = vld [vmem:[#allocation2 + $0x88] sm:$0xff]
    %v85 = vld [vmem:[#allocation2 + $0x90] sm:$0xff]
    %v86 = vld [vmem:[#allocation2 + $0x98] sm:$0xff]
    %v87 = vld [vmem:[#allocation2 + $0xa0] sm:$0xff]
    %v88 = vld [vmem:[#allocation2 + $0xa8] sm:$0xff]
    %v89 = vld [vmem:[#allocation2 + $0xb0] sm:$0xff]
    %v90 = vld [vmem:[#allocation2 + $0xb8] sm:$0xff]
    %v91 = vld [vmem:[#allocation2 + $0xc0] sm:$0xff]
    %v92 = vld [vmem:[#allocation2 + $0xc8] sm:$0xff]
    %v93 = vld [vmem:[#allocation2 + $0xd0] sm:$0xff]
    %v94 = vld [vmem:[#allocation2 + $0xd8] sm:$0xff]
    %v95 = vld [vmem:[#allocation2 + $0xe0] sm:$0xff]
    %v96 = vld [vmem:[#allocation2 + $0xe8] sm:$0xff]
    %v97 = vld [vmem:[#allocation2 + $0xf0] sm:$0xff]
    %v98 = vld [vmem:[#allocation2 + $0xf8] sm:$0xff]
    %v99 = vld [vmem:[#allocation2 + $0x100] sm:$0xff]
    %v100 = vld [vmem:[#allocation2 + $0x108] sm:$0xff]
    %v101 = vld [vmem:[#allocation2 + $0x110] sm:$0xff]
    %v102 = vld [vmem:[#allocation2 + $0x118] sm:$0xff]
    %v103 = vld [vmem:[#allocation2 + $0x120] sm:$0xff]
    %v104 = vld [vmem:[#allocation2 + $0x128] sm:$0xff]
    %v105 = vld [vmem:[#allocation2 + $0x130] sm:$0xff]
    %v106 = vld [vmem:[#allocation2 + $0x138] sm:$0xff]
    %v107 = vld [vmem:[#allocation2 + $0x140] sm:$0xff]
    %v108 = vld [vmem:[#allocation2 + $0x148] sm:$0xff]
    %v109 = vld [vmem:[#allocation2 + $0x150] sm:$0xff]
    %v110 = vld [vmem:[#allocation2 + $0x158] sm:$0xff]
    %v111 = vld [vmem:[#allocation2 + $0x160] sm:$0xff]
    %v112 = vld [vmem:[#allocation2 + $0x168] sm:$0xff]
    %v113 = vld [vmem:[#allocation2 + $0x170] sm:$0xff]
    %v114 = vld [vmem:[#allocation2 + $0x178] sm:$0xff]
    %v115 = vld [vmem:[#allocation2 + $0x180] sm:$0xff]
    %v116 = vld [vmem:[#allocation2 + $0x188] sm:$0xff]
    %v117 = vld [vmem:[#allocation2 + $0x190] sm:$0xff]
    %v118 = vld [vmem:[#allocation2 + $0x198] sm:$0xff]
    %v119 = vld [vmem:[#allocation2 + $0x1a0] sm:$0xff]
    %v120 = vld [vmem:[#allocation2 + $0x1a8] sm:$0xff]
    %v121 = vld [vmem:[#allocation2 + $0x1b0] sm:$0xff]
    %v122 = vld [vmem:[#allocation2 + $0x1b8] sm:$0xff]
    %v123 = vld [vmem:[#allocation2 + $0x1c0] sm:$0xff]
    %v124 = vld [vmem:[#allocation2 + $0x1c8] sm:$0xff]
    %v125 = vld [vmem:[#allocation2 + $0x1d0] sm:$0xff]
    %v126 = vld [vmem:[#allocation2 + $0x1d8] sm:$0xff]
    %v127 = vld [vmem:[#allocation2 + $0x1e0] sm:$0xff]
    %v128 = vld [vmem:[#allocation2 + $0x1e8] sm:$0xff]
    %v129 = vld [vmem:[#allocation2 + $0x1f0] sm:$0xff]
    %v130 = vld [vmem:[#allocation2 + $0x1f8] sm:$0xff]
    %v131 = vld [vmem:[#allocation2 + $0x200] sm:$0xff]
    %v132 = vld [vmem:[#allocation2 + $0x208] sm:$0xff]
    %v133 = vld [vmem:[#allocation2 + $0x210] sm:$0xff]
    %v134 = vld [vmem:[#allocation2 + $0x218] sm:$0xff]
    %v135 = vld [vmem:[#allocation2 + $0x220] sm:$0xff]
    %v136 = vld [vmem:[#allocation2 + $0x228] sm:$0xff]
    %v137 = vld [vmem:[#allocation2 + $0x230] sm:$0xff]
    %v138 = vld [vmem:[#allocation2 + $0x238] sm:$0xff]
    %v139 = vld [vmem:[#allocation2 + $0x240] sm:$0xff]
    %v140 = vld [vmem:[#allocation2 + $0x248] sm:$0xff]
    %v141 = vld [vmem:[#allocation2 + $0x250] sm:$0xff]
    %v142 = vld [vmem:[#allocation2 + $0x258] sm:$0xff]
    %v143 = vld [vmem:[#allocation2 + $0x260] sm:$0xff]
    %v144 = vld [vmem:[#allocation2 + $0x268] sm:$0xff]
    %v145 = vld [vmem:[#allocation2 + $0x270] sm:$0xff]
    %v146 = vld [vmem:[#allocation2 + $0x278] sm:$0xff]
    %v147 = vld [vmem:[#allocation2 + $0x280] sm:$0xff]
    %v148 = vld [vmem:[#allocation2 + $0x288] sm:$0xff]
    %v149 = vld [vmem:[#allocation2 + $0x290] sm:$0xff]
    %v150 = vld [vmem:[#allocation2 + $0x298] sm:$0xff]
    %v151 = vld [vmem:[#allocation2 + $0x2a0] sm:$0xff]
    %v152 = vld [vmem:[#allocation2 + $0x2a8] sm:$0xff]
    %v153 = vld [vmem:[#allocation2 + $0x2b0] sm:$0xff]
    %v154 = vld [vmem:[#allocation2 + $0x2b8] sm:$0xff]
    %v155 = vld [vmem:[#allocation2 + $0x2c0] sm:$0xff]
    %v156 = vld [vmem:[#allocation2 + $0x2c8] sm:$0xff]
    %v157 = vld [vmem:[#allocation2 + $0x2d0] sm:$0xff]
    %v158 = vld [vmem:[#allocation2 + $0x2d8] sm:$0xff]
    %v159 = vld [vmem:[#allocation2 + $0x2e0] sm:$0xff]
    %v160 = vld [vmem:[#allocation2 + $0x2e8] sm:$0xff]
    %v161 = vld [vmem:[#allocation2 + $0x2f0] sm:$0xff]
    %v162 = vld [vmem:[#allocation2 + $0x2f8] sm:$0xff]
    %v163 = vld [vmem:[#allocation2 + $0x300] sm:$0xff]
    %v164 = vld [vmem:[#allocation2 + $0x308] sm:$0xff]
    %v165 = vld [vmem:[#allocation2 + $0x310] sm:$0xff]
    %v166 = vld [vmem:[#allocation2 + $0x318] sm:$0xff]
    %v167 = vld [vmem:[#allocation2 + $0x320] sm:$0xff]
    %v168 = vld [vmem:[#allocation2 + $0x328] sm:$0xff]
    %v169 = vld [vmem:[#allocation2 + $0x330] sm:$0xff]
    %v170 = vld [vmem:[#allocation2 + $0x338] sm:$0xff]
    %v171 = vld [vmem:[#allocation2 + $0x340] sm:$0xff]
    %v172 = vld [vmem:[#allocation2 + $0x348] sm:$0xff]
    %v173 = vld [vmem:[#allocation2 + $0x350] sm:$0xff]
    %v174 = vld [vmem:[#allocation2 + $0x358] sm:$0xff]
    %v175 = vld [vmem:[#allocation2 + $0x360] sm:$0xff]
    %v176 = vld [vmem:[#allocation2 + $0x368] sm:$0xff]
    %v177 = vld [vmem:[#allocation2 + $0x370] sm:$0xff]
    %v178 = vld [vmem:[#allocation2 + $0x378] sm:$0xff]
    %v179 = vld [vmem:[#allocation2 + $0x380] sm:$0xff]
    %v180 = vld [vmem:[#allocation2 + $0x388] sm:$0xff]
    %v181 = vld [vmem:[#allocation2 + $0x390] sm:$0xff]
    %v182 = vld [vmem:[#allocation2 + $0x398] sm:$0xff]
    %v183 = vld [vmem:[#allocation2 + $0x3a0] sm:$0xff]
    %v184 = vld [vmem:[#allocation2 + $0x3a8] sm:$0xff]
    %v185 = vld [vmem:[#allocation2 + $0x3b0] sm:$0xff]
    %v186 = vld [vmem:[#allocation2 + $0x3b8] sm:$0xff]
    %v187 = vld [vmem:[#allocation2 + $0x3c0] sm:$0xff]
    %v188 = vld [vmem:[#allocation2 + $0x3c8] sm:$0xff]
    %v189 = vld [vmem:[#allocation2 + $0x3d0] sm:$0xff]
    %v190 = vld [vmem:[#allocation2 + $0x3d8] sm:$0xff]
    %v191 = vld [vmem:[#allocation2 + $0x3e0] sm:$0xff]
    %v192 = vld [vmem:[#allocation2 + $0x3e8] sm:$0xff]
    %v193 = vld [vmem:[#allocation2 + $0x3f0] sm:$0xff]
    %v194 = vld [vmem:[#allocation2 + $0x3f8] sm:$0xff]
    %v195 = vld [vmem:[#allocation2 + $0x400] sm:$0xff]
    %v196 = vld [vmem:[#allocation2 + $0x408] sm:$0xff]
    %v197 = vld [vmem:[#allocation2 + $0x410] sm:$0xff]
    %v198 = vld [vmem:[#allocation2 + $0x418] sm:$0xff]
    %v199 = vld [vmem:[#allocation2 + $0x420] sm:$0xff]
    %v200 = vld [vmem:[#allocation2 + $0x428] sm:$0xff]
    %v201 = vld [vmem:[#allocation2 + $0x430] sm:$0xff]
    %v202 = vld [vmem:[#allocation2 + $0x438] sm:$0xff]
    %v203 = vld [vmem:[#allocation2 + $0x440] sm:$0xff]
    %v204 = vld [vmem:[#allocation2 + $0x448] sm:$0xff]
    %v205 = vld [vmem:[#allocation2 + $0x450] sm:$0xff]
    %v206 = vld [vmem:[#allocation2 + $0x458] sm:$0xff]
    %v207 = vld [vmem:[#allocation2 + $0x460] sm:$0xff]
    %v208 = vld [vmem:[#allocation2 + $0x468] sm:$0xff]
    %v209 = vld [vmem:[#allocation2 + $0x470] sm:$0xff]
    %v210 = vld [vmem:[#allocation2 + $0x478] sm:$0xff]
    %v211 = vld [vmem:[#allocation2 + $0x480] sm:$0xff]
    %v212 = vld [vmem:[#allocation2 + $0x488] sm:$0xff]
    %v213 = vld [vmem:[#allocation2 + $0x490] sm:$0xff]
    %v214 = vld [vmem:[#allocation2 + $0x498] sm:$0xff]
    %v215 = vld [vmem:[#allocation2 + $0x4a0] sm:$0xff]
    %v216 = vld [vmem:[#allocation2 + $0x4a8] sm:$0xff]
    %v217 = vld [vmem:[#allocation2 + $0x4b0] sm:$0xff]
    %v218 = vld [vmem:[#allocation2 + $0x4b8] sm:$0xff]
    %v219 = vld [vmem:[#allocation2 + $0x4c0] sm:$0xff]
    %v220 = vld [vmem:[#allocation2 + $0x4c8] sm:$0xff]
    %v221 = vld [vmem:[#allocation2 + $0x4d0] sm:$0xff]
    %v222 = vld [vmem:[#allocation2 + $0x4d8] sm:$0xff]
    %v223 = vld [vmem:[#allocation2 + $0x4e0] sm:$0xff]
    %v224 = vld [vmem:[#allocation2 + $0x4e8] sm:$0xff]
    %v225 = vld [vmem:[#allocation2 + $0x4f0] sm:$0xff]
    %v226 = vld [vmem:[#allocation2 + $0x4f8] sm:$0xff]
    %v227 = vld [vmem:[#allocation2 + $0x500] sm:$0xff]
    %v228 = vld [vmem:[#allocation2 + $0x508] sm:$0xff]
    %v229 = vld [vmem:[#allocation2 + $0x510] sm:$0xff]
    %v230 = vld [vmem:[#allocation2 + $0x518] sm:$0xff]
    %v231 = vld [vmem:[#allocation2 + $0x520] sm:$0xff]
    %v232 = vld [vmem:[#allocation2 + $0x528] sm:$0xff]
    %v233 = vld [vmem:[#allocation2 + $0x530] sm:$0xff]
    %v234 = vld [vmem:[#allocation2 + $0x538] sm:$0xff]
    %v235 = vld [vmem:[#allocation2 + $0x540] sm:$0xff]
    %v236 = vld [vmem:[#allocation2 + $0x548] sm:$0xff]
    %v237 = vld [vmem:[#allocation2 + $0x550] sm:$0xff]
    %v238 = vld [vmem:[#allocation2 + $0x558] sm:$0xff]
    %v239 = vld [vmem:[#allocation2 + $0x560] sm:$0xff]
    %v240 = vld [vmem:[#allocation2 + $0x568] sm:$0xff]
    %v241 = vld [vmem:[#allocation2 + $0x570] sm:$0xff]
    %v242 = vld [vmem:[#allocation2 + $0x578] sm:$0xff]
    %v243 = vld [vmem:[#allocation2 + $0x580] sm:$0xff]
    %v244 = vld [vmem:[#allocation2 + $0x588] sm:$0xff]
    %v245 = vld [vmem:[#allocation2 + $0x590] sm:$0xff]
    %v246 = vld [vmem:[#allocation2 + $0x598] sm:$0xff]
    %v247 = vld [vmem:[#allocation2 + $0x5a0] sm:$0xff]
    %v248 = vld [vmem:[#allocation2 + $0x5a8] sm:$0xff]
    %v249 = vld [vmem:[#allocation2 + $0x5b0] sm:$0xff]
    %v250 = vld [vmem:[#allocation2 + $0x5b8] sm:$0xff]
    %v251 = vld [vmem:[#allocation2 + $0x5c0] sm:$0xff]
    %v252 = vld [vmem:[#allocation2 + $0x5c8] sm:$0xff]
    %v253 = vld [vmem:[#allocation2 + $0x5d0] sm:$0xff]
    %v254 = vld [vmem:[#allocation2 + $0x5d8] sm:$0xff]
    %v255 = vld [vmem:[#allocation2 + $0x5e0] sm:$0xff]
    %v256 = vld [vmem:[#allocation2 + $0x5e8] sm:$0xff]
    %v257 = vld [vmem:[#allocation2 + $0x5f0] sm:$0xff]
    %v258 = vld [vmem:[#allocation2 + $0x5f8] sm:$0xff]
    %v259 = vld [vmem:[#allocation2 + $0x600] sm:$0xff]
    %v260 = vld [vmem:[#allocation2 + $0x608] sm:$0xff]
    %v261 = vld [vmem:[#allocation2 + $0x610] sm:$0xff]
    %v262 = vld [vmem:[#allocation2 + $0x618] sm:$0xff]
    %v263 = vld [vmem:[#allocation2 + $0x620] sm:$0xff]
    %v264 = vld [vmem:[#allocation2 + $0x628] sm:$0xff]
    %v265 = vld [vmem:[#allocation2 + $0x630] sm:$0xff]
    %v266 = vld [vmem:[#allocation2 + $0x638] sm:$0xff]
    %v267 = vld [vmem:[#allocation2 + $0x640] sm:$0xff]
    %v268 = vld [vmem:[#allocation2 + $0x648] sm:$0xff]
    %v269 = vld [vmem:[#allocation2 + $0x650] sm:$0xff]
    %v270 = vld [vmem:[#allocation2 + $0x658] sm:$0xff]
    %v271 = vld [vmem:[#allocation2 + $0x660] sm:$0xff]
    %v272 = vld [vmem:[#allocation2 + $0x668] sm:$0xff]
    %v273 = vld [vmem:[#allocation2 + $0x670] sm:$0xff]
    %v274 = vld [vmem:[#allocation2 + $0x678] sm:$0xff]
    %v275 = vld [vmem:[#allocation2 + $0x680] sm:$0xff]
    %v276 = vld [vmem:[#allocation2 + $0x688] sm:$0xff]
    %v277 = vld [vmem:[#allocation2 + $0x690] sm:$0xff]
    %v278 = vld [vmem:[#allocation2 + $0x698] sm:$0xff]
    %v279 = vld [vmem:[#allocation2 + $0x6a0] sm:$0xff]
    %v280 = vld [vmem:[#allocation2 + $0x6a8] sm:$0xff]
    %v281 = vld [vmem:[#allocation2 + $0x6b0] sm:$0xff]
    %v282 = vld [vmem:[#allocation2 + $0x6b8] sm:$0xff]
    %v283 = vld [vmem:[#allocation2 + $0x6c0] sm:$0xff]
    %v284 = vld [vmem:[#allocation2 + $0x6c8] sm:$0xff]
    %v285 = vld [vmem:[#allocation2 + $0x6d0] sm:$0xff]
    %v286 = vld [vmem:[#allocation2 + $0x6d8] sm:$0xff]
    %v287 = vld [vmem:[#allocation2 + $0x6e0] sm:$0xff]
    %v288 = vld [vmem:[#allocation2 + $0x6e8] sm:$0xff]
    %v289 = vld [vmem:[#allocation2 + $0x6f0] sm:$0xff]
    %v290 = vld [vmem:[#allocation2 + $0x6f8] sm:$0xff]
    %v291 = vld [vmem:[#allocation2 + $0x700] sm:$0xff]
    %v292 = vld [vmem:[#allocation2 + $0x708] sm:$0xff]
    %v293 = vld [vmem:[#allocation2 + $0x710] sm:$0xff]
    %v294 = vld [vmem:[#allocation2 + $0x718] sm:$0xff]
    %v295 = vld [vmem:[#allocation2 + $0x720] sm:$0xff]
    %v296 = vld [vmem:[#allocation2 + $0x728] sm:$0xff]
    %v297 = vld [vmem:[#allocation2 + $0x730] sm:$0xff]
    %v298 = vld [vmem:[#allocation2 + $0x738] sm:$0xff]
    %v299 = vld [vmem:[#allocation2 + $0x740] sm:$0xff]
    %v300 = vld [vmem:[#allocation2 + $0x748] sm:$0xff]
    %v301 = vld [vmem:[#allocation2 + $0x750] sm:$0xff]
    %v302 = vld [vmem:[#allocation2 + $0x758] sm:$0xff]
    %v303 = vld [vmem:[#allocation2 + $0x760] sm:$0xff]
    %v304 = vld [vmem:[#allocation2 + $0x768] sm:$0xff]
    %v305 = vld [vmem:[#allocation2 + $0x770] sm:$0xff]
    %v306 = vld [vmem:[#allocation2 + $0x778] sm:$0xff]
    %v307 = vld [vmem:[#allocation2 + $0x780] sm:$0xff]
    %v308 = vld [vmem:[#allocation2 + $0x788] sm:$0xff]
    %v309 = vld [vmem:[#allocation2 + $0x790] sm:$0xff]
    %v310 = vld [vmem:[#allocation2 + $0x798] sm:$0xff]
    %v311 = vld [vmem:[#allocation2 + $0x7a0] sm:$0xff]
    %v312 = vld [vmem:[#allocation2 + $0x7a8] sm:$0xff]
    %v313 = vld [vmem:[#allocation2 + $0x7b0] sm:$0xff]
    %v314 = vld [vmem:[#allocation2 + $0x7b8] sm:$0xff]
    %v315 = vld [vmem:[#allocation2 + $0x7c0] sm:$0xff]
    %v316 = vld [vmem:[#allocation2 + $0x7c8] sm:$0xff]
    %v317 = vld [vmem:[#allocation2 + $0x7d0] sm:$0xff]
    %v318 = vld [vmem:[#allocation2 + $0x7d8] sm:$0xff]
    %v319 = vld [vmem:[#allocation2 + $0x7e0] sm:$0xff]
    %v320 = vld [vmem:[#allocation2 + $0x7e8] sm:$0xff]
    %v321 = vld [vmem:[#allocation2 + $0x7f0] sm:$0xff]
    %v322 = vld [vmem:[#allocation2 + $0x7f8] sm:$0xff]
    %v323 = vld [vmem:[#allocation2 + $0x800] sm:$0xff]
    %v324 = vld [vmem:[#allocation2 + $0x808] sm:$0xff]
    %v325 = vld [vmem:[#allocation2 + $0x810] sm:$0xff]
    %v326 = vld [vmem:[#allocation2 + $0x818] sm:$0xff]
    %v327 = vld [vmem:[#allocation2 + $0x820] sm:$0xff]
    %v328 = vld [vmem:[#allocation2 + $0x828] sm:$0xff]
    %v329 = vld [vmem:[#allocation2 + $0x830] sm:$0xff]
    %v330 = vld [vmem:[#allocation2 + $0x838] sm:$0xff]
    %v331 = vld [vmem:[#allocation2 + $0x840] sm:$0xff]
    %v332 = vld [vmem:[#allocation2 + $0x848] sm:$0xff]
    %v333 = vld [vmem:[#allocation2 + $0x850] sm:$0xff]
    %v334 = vld [vmem:[#allocation2 + $0x858] sm:$0xff]
    %v335 = vld [vmem:[#allocation2 + $0x860] sm:$0xff]
    %v336 = vld [vmem:[#allocation2 + $0x868] sm:$0xff]
    %v337 = vld [vmem:[#allocation2 + $0x870] sm:$0xff]
    %v338 = vld [vmem:[#allocation2 + $0x878] sm:$0xff]
    %v339 = vld [vmem:[#allocation2 + $0x880] sm:$0xff]
    %v340 = vld [vmem:[#allocation2 + $0x888] sm:$0xff]
    %v341 = vld [vmem:[#allocation2 + $0x890] sm:$0xff]
    %v342 = vld [vmem:[#allocation2 + $0x898] sm:$0xff]
    %v343 = vld [vmem:[#allocation2 + $0x8a0] sm:$0xff]
    %v344 = vld [vmem:[#allocation2 + $0x8a8] sm:$0xff]
    %v345 = vld [vmem:[#allocation2 + $0x8b0] sm:$0xff]
    %v346 = vld [vmem:[#allocation2 + $0x8b8] sm:$0xff]
    %v347 = vld [vmem:[#allocation2 + $0x8c0] sm:$0xff]
    %v348 = vld [vmem:[#allocation2 + $0x8c8] sm:$0xff]
    %v349 = vld [vmem:[#allocation2 + $0x8d0] sm:$0xff]
    %v350 = vld [vmem:[#allocation2 + $0x8d8] sm:$0xff]
    %v351 = vld [vmem:[#allocation2 + $0x8e0] sm:$0xff]
    %v352 = vld [vmem:[#allocation2 + $0x8e8] sm:$0xff]
    %v353 = vld [vmem:[#allocation2 + $0x8f0] sm:$0xff]
    %v354 = vld [vmem:[#allocation2 + $0x8f8] sm:$0xff]
    %v355 = vld [vmem:[#allocation2 + $0x900] sm:$0xff]
    %v356 = vld [vmem:[#allocation2 + $0x908] sm:$0xff]
    %v357 = vld [vmem:[#allocation2 + $0x910] sm:$0xff]
    %v358 = vld [vmem:[#allocation2 + $0x918] sm:$0xff]
    %v359 = vld [vmem:[#allocation2 + $0x920] sm:$0xff]
    %v360 = vld [vmem:[#allocation2 + $0x928] sm:$0xff]
    %v361 = vld [vmem:[#allocation2 + $0x930] sm:$0xff]
    %v362 = vld [vmem:[#allocation2 + $0x938] sm:$0xff]
    %v363 = vld [vmem:[#allocation2 + $0x940] sm:$0xff]
    %v364 = vld [vmem:[#allocation2 + $0x948] sm:$0xff]
    %v365 = vld [vmem:[#allocation2 + $0x950] sm:$0xff]
    %v366 = vld [vmem:[#allocation2 + $0x958] sm:$0xff]
    %v367 = vld [vmem:[#allocation2 + $0x960] sm:$0xff]
    %v368 = vld [vmem:[#allocation2 + $0x968] sm:$0xff]
    %v369 = vld [vmem:[#allocation2 + $0x970] sm:$0xff]
    %v370 = vld [vmem:[#allocation2 + $0x978] sm:$0xff]
    %v371 = vld [vmem:[#allocation2 + $0x980] sm:$0xff]
    %v372 = vld [vmem:[#allocation2 + $0x988] sm:$0xff]
    %v373 = vld [vmem:[#allocation2 + $0x990] sm:$0xff]
    %v374 = vld [vmem:[#allocation2 + $0x998] sm:$0xff]
    %v375 = vld [vmem:[#allocation2 + $0x9a0] sm:$0xff]
    %v376 = vld [vmem:[#allocation2 + $0x9a8] sm:$0xff]
    %v377 = vld [vmem:[#allocation2 + $0x9b0] sm:$0xff]
    %v378 = vld [vmem:[#allocation2 + $0x9b8] sm:$0xff]
    %v379 = vld [vmem:[#allocation2 + $0x9c0] sm:$0xff]
    %v380 = vld [vmem:[#allocation2 + $0x9c8] sm:$0xff]
    %v381 = vld [vmem:[#allocation2 + $0x9d0] sm:$0xff]
    %v382 = vld [vmem:[#allocation2 + $0x9d8] sm:$0xff]
    %v383 = vld [vmem:[#allocation2 + $0x9e0] sm:$0xff]
    %v384 = vld [vmem:[#allocation2 + $0x9e8] sm:$0xff]
    %v385 = vld [vmem:[#allocation2 + $0x9f0] sm:$0xff]
    %v386 = vld [vmem:[#allocation2 + $0x9f8] sm:$0xff]
    %v387 = vld [vmem:[#allocation2 + $0xa00] sm:$0xff]
    %v388 = vld [vmem:[#allocation2 + $0xa08] sm:$0xff]
    %v389 = vld [vmem:[#allocation2 + $0xa10] sm:$0xff]
    %v390 = vld [vmem:[#allocation2 + $0xa18] sm:$0xff]
    %v391 = vld [vmem:[#allocation2 + $0xa20] sm:$0xff]
    %v392 = vld [vmem:[#allocation2 + $0xa28] sm:$0xff]
    %v393 = vld [vmem:[#allocation2 + $0xa30] sm:$0xff]
    %v394 = vld [vmem:[#allocation2 + $0xa38] sm:$0xff]
    %v395 = vld [vmem:[#allocation2 + $0xa40] sm:$0xff]
    %v396 = vld [vmem:[#allocation2 + $0xa48] sm:$0xff]
    %v397 = vld [vmem:[#allocation2 + $0xa50] sm:$0xff]
    %v398 = vld [vmem:[#allocation2 + $0xa58] sm:$0xff]
    %v399 = vld [vmem:[#allocation2 + $0xa60] sm:$0xff]
    %v400 = vld [vmem:[#allocation2 + $0xa68] sm:$0xff]
    %v401 = vld [vmem:[#allocation2 + $0xa70] sm:$0xff]
    %v402 = vld [vmem:[#allocation2 + $0xa78] sm:$0xff]
    %v403 = vld [vmem:[#allocation2 + $0xa80] sm:$0xff]
    %v404 = vld [vmem:[#allocation2 + $0xa88] sm:$0xff]
    %v405 = vld [vmem:[#allocation2 + $0xa90] sm:$0xff]
    %v406 = vld [vmem:[#allocation2 + $0xa98] sm:$0xff]
    %v407 = vld [vmem:[#allocation2 + $0xaa0] sm:$0xff]
    %v408 = vld [vmem:[#allocation2 + $0xaa8] sm:$0xff]
    %v409 = vld [vmem:[#allocation2 + $0xab0] sm:$0xff]
    %v410 = vld [vmem:[#allocation2 + $0xab8] sm:$0xff]
    %v411 = vld [vmem:[#allocation2 + $0xac0] sm:$0xff]
    %v412 = vld [vmem:[#allocation2 + $0xac8] sm:$0xff]
    %v413 = vld [vmem:[#allocation2 + $0xad0] sm:$0xff]
    %v414 = vld [vmem:[#allocation2 + $0xad8] sm:$0xff]
    %v415 = vld [vmem:[#allocation2 + $0xae0] sm:$0xff]
    %v416 = vld [vmem:[#allocation2 + $0xae8] sm:$0xff]
    %v417 = vld [vmem:[#allocation2 + $0xaf0] sm:$0xff]
    %v418 = vld [vmem:[#allocation2 + $0xaf8] sm:$0xff]
    %v419 = vld [vmem:[#allocation2 + $0xb00] sm:$0xff]
    %v420 = vld [vmem:[#allocation2 + $0xb08] sm:$0xff]
    %v421 = vld [vmem:[#allocation2 + $0xb10] sm:$0xff]
    %v422 = vld [vmem:[#allocation2 + $0xb18] sm:$0xff]
    %v423 = vld [vmem:[#allocation2 + $0xb20] sm:$0xff]
    %v424 = vld [vmem:[#allocation2 + $0xb28] sm:$0xff]
    %v425 = vld [vmem:[#allocation2 + $0xb30] sm:$0xff]
    %v426 = vld [vmem:[#allocation2 + $0xb38] sm:$0xff]
    %v427 = vld [vmem:[#allocation2 + $0xb40] sm:$0xff]
    %v428 = vld [vmem:[#allocation2 + $0xb48] sm:$0xff]
    %v429 = vld [vmem:[#allocation2 + $0xb50] sm:$0xff]
    %v430 = vld [vmem:[#allocation2 + $0xb58] sm:$0xff]
    %v431 = vld [vmem:[#allocation2 + $0xb60] sm:$0xff]
    %v432 = vld [vmem:[#allocation2 + $0xb68] sm:$0xff]
    %v433 = vld [vmem:[#allocation2 + $0xb70] sm:$0xff]
    %v434 = vld [vmem:[#allocation2 + $0xb78] sm:$0xff]
    %v435 = vld [vmem:[#allocation2 + $0xb80] sm:$0xff]
    %v436 = vld [vmem:[#allocation2 + $0xb88] sm:$0xff]
    %v437 = vld [vmem:[#allocation2 + $0xb90] sm:$0xff]
    %v438 = vld [vmem:[#allocation2 + $0xb98] sm:$0xff]
    %v439 = vld [vmem:[#allocation2 + $0xba0] sm:$0xff]
    %v440 = vld [vmem:[#allocation2 + $0xba8] sm:$0xff]
    %v441 = vld [vmem:[#allocation2 + $0xbb0] sm:$0xff]
    %v442 = vld [vmem:[#allocation2 + $0xbb8] sm:$0xff]
    %v443 = vld [vmem:[#allocation2 + $0xbc0] sm:$0xff]
    %v444 = vld [vmem:[#allocation2 + $0xbc8] sm:$0xff]
    %v445 = vld [vmem:[#allocation2 + $0xbd0] sm:$0xff]
    %v446 = vld [vmem:[#allocation2 + $0xbd8] sm:$0xff]
    %v447 = vld [vmem:[#allocation2 + $0xbe0] sm:$0xff]
    %v448 = vld [vmem:[#allocation2 + $0xbe8] sm:$0xff]
    %v449 = vld [vmem:[#allocation2 + $0xbf0] sm:$0xff]
    %v450 = vld [vmem:[#allocation2 + $0xbf8] sm:$0xff]
    %v451 = vld [vmem:[#allocation2 + $0xc00] sm:$0xff]
    %v452 = vld [vmem:[#allocation2 + $0xc08] sm:$0xff]
    %v453 = vld [vmem:[#allocation2 + $0xc10] sm:$0xff]
    %v454 = vld [vmem:[#allocation2 + $0xc18] sm:$0xff]
    %v455 = vld [vmem:[#allocation2 + $0xc20] sm:$0xff]
    %v456 = vld [vmem:[#allocation2 + $0xc28] sm:$0xff]
    %v457 = vld [vmem:[#allocation2 + $0xc30] sm:$0xff]
    %v458 = vld [vmem:[#allocation2 + $0xc38] sm:$0xff]
    %v459 = vld [vmem:[#allocation2 + $0xc40] sm:$0xff]
    %v460 = vld [vmem:[#allocation2 + $0xc48] sm:$0xff]
    %v461 = vld [vmem:[#allocation2 + $0xc50] sm:$0xff]
    %v462 = vld [vmem:[#allocation2 + $0xc58] sm:$0xff]
    %v463 = vld [vmem:[#allocation2 + $0xc60] sm:$0xff]
    %v464 = vld [vmem:[#allocation2 + $0xc68] sm:$0xff]
    %v465 = vld [vmem:[#allocation2 + $0xc70] sm:$0xff]
    %v466 = vld [vmem:[#allocation2 + $0xc78] sm:$0xff]
    %v467 = vld [vmem:[#allocation2 + $0xc80] sm:$0xff]
    %v468 = vld [vmem:[#allocation2 + $0xc88] sm:$0xff]
    %v469 = vld [vmem:[#allocation2 + $0xc90] sm:$0xff]
    %v470 = vld [vmem:[#allocation2 + $0xc98] sm:$0xff]
    %v471 = vld [vmem:[#allocation2 + $0xca0] sm:$0xff]
    %v472 = vld [vmem:[#allocation2 + $0xca8] sm:$0xff]
    %v473 = vld [vmem:[#allocation2 + $0xcb0] sm:$0xff]
    %v474 = vld [vmem:[#allocation2 + $0xcb8] sm:$0xff]
    %v475 = vld [vmem:[#allocation2 + $0xcc0] sm:$0xff]
    %v476 = vld [vmem:[#allocation2 + $0xcc8] sm:$0xff]
    %v477 = vld [vmem:[#allocation2 + $0xcd0] sm:$0xff]
    %v478 = vld [vmem:[#allocation2 + $0xcd8] sm:$0xff]
    %v479 = vld [vmem:[#allocation2 + $0xce0] sm:$0xff]
    %v480 = vld [vmem:[#allocation2 + $0xce8] sm:$0xff]
    %v481 = vld [vmem:[#allocation2 + $0xcf0] sm:$0xff]
    %v482 = vld [vmem:[#allocation2 + $0xcf8] sm:$0xff]
    %v483 = vld [vmem:[#allocation2 + $0xd00] sm:$0xff]
    %v484 = vld [vmem:[#allocation2 + $0xd08] sm:$0xff]
    %v485 = vld [vmem:[#allocation2 + $0xd10] sm:$0xff]
    %v486 = vld [vmem:[#allocation2 + $0xd18] sm:$0xff]
    %v487 = vld [vmem:[#allocation2 + $0xd20] sm:$0xff]
    %v488 = vld [vmem:[#allocation2 + $0xd28] sm:$0xff]
    %v489 = vld [vmem:[#allocation2 + $0xd30] sm:$0xff]
    %v490 = vld [vmem:[#allocation2 + $0xd38] sm:$0xff]
    %v491 = vld [vmem:[#allocation2 + $0xd40] sm:$0xff]
    %v492 = vld [vmem:[#allocation2 + $0xd48] sm:$0xff]
    %v493 = vld [vmem:[#allocation2 + $0xd50] sm:$0xff]
    %v494 = vld [vmem:[#allocation2 + $0xd58] sm:$0xff]
    %v495 = vld [vmem:[#allocation2 + $0xd60] sm:$0xff]
    %v496 = vld [vmem:[#allocation2 + $0xd68] sm:$0xff]
    %v497 = vld [vmem:[#allocation2 + $0xd70] sm:$0xff]
    %v498 = vld [vmem:[#allocation2 + $0xd78] sm:$0xff]
    %v499 = vld [vmem:[#allocation2 + $0xd80] sm:$0xff]
    %v500 = vld [vmem:[#allocation2 + $0xd88] sm:$0xff]
    %v501 = vld [vmem:[#allocation2 + $0xd90] sm:$0xff]
    %v502 = vld [vmem:[#allocation2 + $0xd98] sm:$0xff]
    %v503 = vld [vmem:[#allocation2 + $0xda0] sm:$0xff]
    %v504 = vld [vmem:[#allocation2 + $0xda8] sm:$0xff]
    %v505 = vld [vmem:[#allocation2 + $0xdb0] sm:$0xff]
    %v506 = vld [vmem:[#allocation2 + $0xdb8] sm:$0xff]
    %v507 = vld [vmem:[#allocation2 + $0xdc0] sm:$0xff]
    %v508 = vld [vmem:[#allocation2 + $0xdc8] sm:$0xff]
    %v509 = vld [vmem:[#allocation2 + $0xdd0] sm:$0xff]
    %v510 = vld [vmem:[#allocation2 + $0xdd8] sm:$0xff]
    %v511 = vld [vmem:[#allocation2 + $0xde0] sm:$0xff]
    %v512 = vld [vmem:[#allocation2 + $0xde8] sm:$0xff]
    %v513 = vld [vmem:[#allocation2 + $0xdf0] sm:$0xff]
    %v514 = vld [vmem:[#allocation2 + $0xdf8] sm:$0xff]
    %v515 = vld [vmem:[#allocation2 + $0xe00] sm:$0xff]
    %v516 = vld [vmem:[#allocation2 + $0xe08] sm:$0xff]
    %v517 = vld [vmem:[#allocation2 + $0xe10] sm:$0xff]
    %v518 = vld [vmem:[#allocation2 + $0xe18] sm:$0xff]
    %v519 = vld [vmem:[#allocation2 + $0xe20] sm:$0xff]
    %v520 = vld [vmem:[#allocation2 + $0xe28] sm:$0xff]
    %v521 = vld [vmem:[#allocation2 + $0xe30] sm:$0xff]
    %v522 = vld [vmem:[#allocation2 + $0xe38] sm:$0xff]
    %v523 = vld [vmem:[#allocation2 + $0xe40] sm:$0xff]
    %v524 = vld [vmem:[#allocation2 + $0xe48] sm:$0xff]
    %v525 = vld [vmem:[#allocation2 + $0xe50] sm:$0xff]
    %v526 = vld [vmem:[#allocation2 + $0xe58] sm:$0xff]
    %v527 = vld [vmem:[#allocation2 + $0xe60] sm:$0xff]
    %v528 = vld [vmem:[#allocation2 + $0xe68] sm:$0xff]
    %v529 = vld [vmem:[#allocation2 + $0xe70] sm:$0xff]
    %v530 = vld [vmem:[#allocation2 + $0xe78] sm:$0xff]
    %v531 = vld [vmem:[#allocation2 + $0xe80] sm:$0xff]
    %v532 = vld [vmem:[#allocation2 + $0xe88] sm:$0xff]
    %v533 = vld [vmem:[#allocation2 + $0xe90] sm:$0xff]
    %v534 = vld [vmem:[#allocation2 + $0xe98] sm:$0xff]
    %v535 = vld [vmem:[#allocation2 + $0xea0] sm:$0xff]
    %v536 = vld [vmem:[#allocation2 + $0xea8] sm:$0xff]
    %v537 = vld [vmem:[#allocation2 + $0xeb0] sm:$0xff]
    %v538 = vld [vmem:[#allocation2 + $0xeb8] sm:$0xff]
    %v539 = vld [vmem:[#allocation2 + $0xec0] sm:$0xff]
    %v540 = vld [vmem:[#allocation2 + $0xec8] sm:$0xff]
    %v541 = vld [vmem:[#allocation2 + $0xed0] sm:$0xff]
    %v542 = vld [vmem:[#allocation2 + $0xed8] sm:$0xff]
    %v543 = vld [vmem:[#allocation2 + $0xee0] sm:$0xff]
    %v544 = vld [vmem:[#allocation2 + $0xee8] sm:$0xff]
    %v545 = vld [vmem:[#allocation2 + $0xef0] sm:$0xff]
    %v546 = vld [vmem:[#allocation2 + $0xef8] sm:$0xff]
    %v547 = vld [vmem:[#allocation2 + $0xf00] sm:$0xff]
    %v548 = vld [vmem:[#allocation2 + $0xf08] sm:$0xff]
    %v549 = vld [vmem:[#allocation2 + $0xf10] sm:$0xff]
    %v550 = vld [vmem:[#allocation2 + $0xf18] sm:$0xff]
    %v551 = vld [vmem:[#allocation2 + $0xf20] sm:$0xff]
    %v552 = vld [vmem:[#allocation2 + $0xf28] sm:$0xff]
    %v553 = vld [vmem:[#allocation2 + $0xf30] sm:$0xff]
    %v554 = vld [vmem:[#allocation2 + $0xf38] sm:$0xff]
    %v555 = vld [vmem:[#allocation2 + $0xf40] sm:$0xff]
    %v556 = vld [vmem:[#allocation2 + $0xf48] sm:$0xff]
    %v557 = vld [vmem:[#allocation2 + $0xf50] sm:$0xff]
    %v558 = vld [vmem:[#allocation2 + $0xf58] sm:$0xff]
    %v559 = vld [vmem:[#allocation2 + $0xf60] sm:$0xff]
    %v560 = vld [vmem:[#allocation2 + $0xf68] sm:$0xff]
    %v561 = vld [vmem:[#allocation2 + $0xf70] sm:$0xff]
    %v562 = vld [vmem:[#allocation2 + $0xf78] sm:$0xff]
    %v563 = vld [vmem:[#allocation2 + $0xf80] sm:$0xff]
    %v564 = vld [vmem:[#allocation2 + $0xf88] sm:$0xff]
    %v565 = vld [vmem:[#allocation2 + $0xf90] sm:$0xff]
    %v566 = vld [vmem:[#allocation2 + $0xf98] sm:$0xff]
    %v567 = vld [vmem:[#allocation2 + $0xfa0] sm:$0xff]
    %v568 = vld [vmem:[#allocation2 + $0xfa8] sm:$0xff]
    %v569 = vld [vmem:[#allocation2 + $0xfb0] sm:$0xff]
    %v570 = vld [vmem:[#allocation2 + $0xfb8] sm:$0xff]
    %v571 = vld [vmem:[#allocation2 + $0xfc0] sm:$0xff]
    %v572 = vld [vmem:[#allocation2 + $0xfc8] sm:$0xff]
    %v573 = vld [vmem:[#allocation2 + $0xfd0] sm:$0xff]
    %v574 = vld [vmem:[#allocation2 + $0xfd8] sm:$0xff]
    %v575 = vld [vmem:[#allocation2 + $0xfe0] sm:$0xff]
    %v576 = vld [vmem:[#allocation2 + $0xfe8] sm:$0xff]
    %v577 = vld [vmem:[#allocation2 + $0xff0] sm:$0xff]
    %v578 = vld [vmem:[#allocation2 + $0xff8] sm:$0xff]
    %v581 = vlaneseq
    %v582 = vshrl.u32 %v581, 7
    %v583 = vsub.s32 0, %v582
    %v584 = vrot.slane %v65, %v583
    %v585 = vlaneseq
    %v586 = vshrl.u32 %v585, 7
    %v587 = vsub.s32 4, %v586
    %v588 = vrot.slane %v65, %v587
    %v589 = vlaneseq
    %v590 = vshrl.u32 %v589, 7
    %v591 = vsub.s32 0, %v590
    %v592 = vrot.slane %v66, %v591
    %v593 = vlaneseq
    %v594 = vshrl.u32 %v593, 7
    %v595 = vsub.s32 4, %v594
    %v596 = vrot.slane %v66, %v595
    %v601 = vlaneseq
    %v602 = vshrl.u32 %v601, 7
    %v603 = vsub.s32 0, %v602
    %v604 = vrot.slane %v584, %v603
    %v605 = vlaneseq
    %v606 = vshrl.u32 %v605, 7
    %v607 = vsub.s32 0, %v606
    %v608 = vrot.slane %v588, %v607
    %v609 = vlaneseq
    %v610 = vshrl.u32 %v609, 7
    %v611 = vsub.s32 0, %v610
    %v612 = vrot.slane %v592, %v611
    %v613 = vlaneseq
    %v614 = vshrl.u32 %v613, 7
    %v615 = vsub.s32 0, %v614
    %v616 = vrot.slane %v596, %v615
    %v619 = vcombine.high %v63, %v63
    %v621 = vunpack.c.l.s4 1983009808
    %v622 = vunpack.c.0.s8 %v621
    %v623 = vlaneseq
    %v624 = vshrl.u32 %v623, 7
    %v625 = vsub.s32 %v622, %v624
    %v626 = vrot.slane %v63, %v625
    %v628 = vunpack.c.l.s4 1983009808
    %v629 = vunpack.c.0.s8 %v628
    %v630 = vlaneseq
    %v631 = vshrl.u32 %v630, 7
    %v632 = vsub.s32 %v629, %v631
    %v633 = vrot.slane %v619, %v632
    %v634 = vcombine.high %v626, %v626
    %v635 = vcombine.high %v633, %v633
    %v636 = vcombine.high %v64, %v64
    %v638 = vunpack.c.l.s4 1983009808
    %v639 = vunpack.c.0.s8 %v638
    %v640 = vlaneseq
    %v641 = vshrl.u32 %v640, 7
    %v642 = vsub.s32 %v639, %v641
    %v643 = vrot.slane %v64, %v642
    %v645 = vunpack.c.l.s4 1983009808
    %v646 = vunpack.c.0.s8 %v645
    %v647 = vlaneseq
    %v648 = vshrl.u32 %v647, 7
    %v649 = vsub.s32 %v646, %v648
    %v650 = vrot.slane %v636, %v649
    %v651 = vcombine.high %v643, %v643
    %v652 = vcombine.high %v650, %v650
    %661 = vmatprep.subr.mxu0 %v128
    %662 = vmatpush1.msra.mxu0 %v127
    %663 = vmatprep.subr.mxu0 %v124
    %664 = vmatpush1.msra.mxu0 %v123
    %665 = vmatprep.subr.mxu0 %v120
    %666 = vmatpush1.msra.mxu0 %v119
    %667 = vmatprep.subr.mxu0 %v116
    %668 = vmatpush1.msra.mxu0 %v115
    %669 = vmatprep.subr.mxu0 %v112
    %670 = vmatpush1.msra.mxu0 %v111
    %671 = vmatprep.subr.mxu0 %v108
    %672 = vmatpush1.msra.mxu0 %v107
    %673 = vmatprep.subr.mxu0 %v104
    %674 = vmatpush1.msra.mxu0 %v103
    %675 = vmatprep.subr.mxu0 %v100
    %676 = vmatpush1.msra.mxu0 %v99
    %677 = vmatprep.subr.mxu0 %v96
    %678 = vmatpush1.msra.mxu0 %v95
    %679 = vmatprep.subr.mxu0 %v92
    %680 = vmatpush1.msra.mxu0 %v91
    %681 = vmatprep.subr.mxu0 %v88
    %682 = vmatpush1.msra.mxu0 %v87
    %683 = vmatprep.subr.mxu0 %v84
    %684 = vmatpush1.msra.mxu0 %v83
    %685 = vmatprep.subr.mxu0 %v80
    %686 = vmatpush1.msra.mxu0 %v79
    %687 = vmatprep.subr.mxu0 %v76
    %688 = vmatpush1.msra.mxu0 %v75
    %689 = vmatprep.subr.mxu0 %v72
    %690 = vmatpush1.msra.mxu0 %v71
    %691 = vmatprep.subr.mxu0 %v68
    %692 = vmatpush1.msra.mxu0 %v67
    %693 = vmatprep.subr.mxu0 %v192
    %694 = vmatpush2.msra.mxu0 %v191
    %695 = vmatprep.subr.mxu0 %v188
    %696 = vmatpush2.msra.mxu0 %v187
    %697 = vmatprep.subr.mxu0 %v184
    %698 = vmatpush2.msra.mxu0 %v183
    %699 = vmatprep.subr.mxu0 %v180
    %700 = vmatpush2.msra.mxu0 %v179
    %701 = vmatprep.subr.mxu0 %v176
    %702 = vmatpush2.msra.mxu0 %v175
    %703 = vmatprep.subr.mxu0 %v172
    %704 = vmatpush2.msra.mxu0 %v171
    %705 = vmatprep.subr.mxu0 %v168
    %706 = vmatpush2.msra.mxu0 %v167
    %707 = vmatprep.subr.mxu0 %v164
    %708 = vmatpush2.msra.mxu0 %v163
    %709 = vmatprep.subr.mxu0 %v160
    %710 = vmatpush2.msra.mxu0 %v159
    %711 = vmatprep.subr.mxu0 %v156
    %712 = vmatpush2.msra.mxu0 %v155
    %713 = vmatprep.subr.mxu0 %v152
    %714 = vmatpush2.msra.mxu0 %v151
    %715 = vmatprep.subr.mxu0 %v148
    %716 = vmatpush2.msra.mxu0 %v147
    %717 = vmatprep.subr.mxu0 %v144
    %718 = vmatpush2.msra.mxu0 %v143
    %719 = vmatprep.subr.mxu0 %v140
    %720 = vmatpush2.msra.mxu0 %v139
    %721 = vmatprep.subr.mxu0 %v136
    %722 = vmatpush2.msra.mxu0 %v135
    %723 = vmatprep.subr.mxu0 %v132
    %724 = vmatpush2.msra.mxu0 %v131
    %725 = vmatprep.mubr.f32.mxu0 %v634
    %726 = vmatmul.mubr.f32.gmra.mxu0 %v626
    %v727 = vpop.f32.mrf.mxu0
    %v728 = vadd.f32 %v604, %v727
    %v729 = vpop.f32.mrf.mxu0
    %v730 = vadd.f32 %v608, %v729
    %731 = vdwg.mxu0
    %732 = vmatprep.subr.mxu0 %v256
    %733 = vmatpush1.msra.mxu0 %v255
    %734 = vmatprep.subr.mxu0 %v252
    %735 = vmatpush1.msra.mxu0 %v251
    %736 = vmatprep.subr.mxu0 %v248
    %737 = vmatpush1.msra.mxu0 %v247
    %738 = vmatprep.subr.mxu0 %v244
    %739 = vmatpush1.msra.mxu0 %v243
    %740 = vmatprep.subr.mxu0 %v240
    %741 = vmatpush1.msra.mxu0 %v239
    %742 = vmatprep.subr.mxu0 %v236
    %743 = vmatpush1.msra.mxu0 %v235
    %744 = vmatprep.subr.mxu0 %v232
    %745 = vmatpush1.msra.mxu0 %v231
    %746 = vmatprep.subr.mxu0 %v228
    %747 = vmatpush1.msra.mxu0 %v227
    %748 = vmatprep.subr.mxu0 %v224
    %749 = vmatpush1.msra.mxu0 %v223
    %750 = vmatprep.subr.mxu0 %v220
    %751 = vmatpush1.msra.mxu0 %v219
    %752 = vmatprep.subr.mxu0 %v216
    %753 = vmatpush1.msra.mxu0 %v215
    %754 = vmatprep.subr.mxu0 %v212
    %755 = vmatpush1.msra.mxu0 %v211
    %756 = vmatprep.subr.mxu0 %v208
    %757 = vmatpush1.msra.mxu0 %v207
    %758 = vmatprep.subr.mxu0 %v204
    %759 = vmatpush1.msra.mxu0 %v203
    %760 = vmatprep.subr.mxu0 %v200
    %761 = vmatpush1.msra.mxu0 %v199
    %762 = vmatprep.subr.mxu0 %v196
    %763 = vmatpush1.msra.mxu0 %v195
    %764 = vmatprep.subr.mxu0 %v320
    %765 = vmatpush2.msra.mxu0 %v319
    %766 = vmatprep.subr.mxu0 %v316
    %767 = vmatpush2.msra.mxu0 %v315
    %768 = vmatprep.subr.mxu0 %v312
    %769 = vmatpush2.msra.mxu0 %v311
    %770 = vmatprep.subr.mxu0 %v308
    %771 = vmatpush2.msra.mxu0 %v307
    %772 = vmatprep.subr.mxu0 %v304
    %773 = vmatpush2.msra.mxu0 %v303
    %774 = vmatprep.subr.mxu0 %v300
    %775 = vmatpush2.msra.mxu0 %v299
    %776 = vmatprep.subr.mxu0 %v296
    %777 = vmatpush2.msra.mxu0 %v295
    %778 = vmatprep.subr.mxu0 %v292
    %779 = vmatpush2.msra.mxu0 %v291
    %780 = vmatprep.subr.mxu0 %v288
    %781 = vmatpush2.msra.mxu0 %v287
    %782 = vmatprep.subr.mxu0 %v284
    %783 = vmatpush2.msra.mxu0 %v283
    %784 = vmatprep.subr.mxu0 %v280
    %785 = vmatpush2.msra.mxu0 %v279
    %786 = vmatprep.subr.mxu0 %v276
    %787 = vmatpush2.msra.mxu0 %v275
    %788 = vmatprep.subr.mxu0 %v272
    %789 = vmatpush2.msra.mxu0 %v271
    %790 = vmatprep.subr.mxu0 %v268
    %791 = vmatpush2.msra.mxu0 %v267
    %792 = vmatprep.subr.mxu0 %v264
    %793 = vmatpush2.msra.mxu0 %v263
    %794 = vmatprep.subr.mxu0 %v260
    %795 = vmatpush2.msra.mxu0 %v259
    %796 = vmatprep.mubr.f32.mxu0 %v635
    %797 = vmatmul.mubr.f32.gmra.mxu0 %v633
    %v798 = vpop.f32.mrf.mxu0
    %v799 = vadd.f32 %v728, %v798
    %v800 = vpop.f32.mrf.mxu0
    %v801 = vadd.f32 %v730, %v800
    %802 = vdwg.mxu0
    %803 = vmatprep.subr.mxu0 %v384
    %804 = vmatpush1.msra.mxu0 %v383
    %805 = vmatprep.subr.mxu0 %v380
    %806 = vmatpush1.msra.mxu0 %v379
    %807 = vmatprep.subr.mxu0 %v376
    %808 = vmatpush1.msra.mxu0 %v375
    %809 = vmatprep.subr.mxu0 %v372
    %810 = vmatpush1.msra.mxu0 %v371
    %811 = vmatprep.subr.mxu0 %v368
    %812 = vmatpush1.msra.mxu0 %v367
    %813 = vmatprep.subr.mxu0 %v364
    %814 = vmatpush1.msra.mxu0 %v363
    %815 = vmatprep.subr.mxu0 %v360
    %816 = vmatpush1.msra.mxu0 %v359
    %817 = vmatprep.subr.mxu0 %v356
    %818 = vmatpush1.msra.mxu0 %v355
    %819 = vmatprep.subr.mxu0 %v352
    %820 = vmatpush1.msra.mxu0 %v351
    %821 = vmatprep.subr.mxu0 %v348
    %822 = vmatpush1.msra.mxu0 %v347
    %823 = vmatprep.subr.mxu0 %v344
    %824 = vmatpush1.msra.mxu0 %v343
    %825 = vmatprep.subr.mxu0 %v340
    %826 = vmatpush1.msra.mxu0 %v339
    %827 = vmatprep.subr.mxu0 %v336
    %828 = vmatpush1.msra.mxu0 %v335
    %829 = vmatprep.subr.mxu0 %v332
    %830 = vmatpush1.msra.mxu0 %v331
    %831 = vmatprep.subr.mxu0 %v328
    %832 = vmatpush1.msra.mxu0 %v327
    %833 = vmatprep.subr.mxu0 %v324
    %834 = vmatpush1.msra.mxu0 %v323
    %835 = vmatprep.subr.mxu0 %v448
    %836 = vmatpush2.msra.mxu0 %v447
    %837 = vmatprep.subr.mxu0 %v444
    %838 = vmatpush2.msra.mxu0 %v443
    %839 = vmatprep.subr.mxu0 %v440
    %840 = vmatpush2.msra.mxu0 %v439
    %841 = vmatprep.subr.mxu0 %v436
    %842 = vmatpush2.msra.mxu0 %v435
    %843 = vmatprep.subr.mxu0 %v432
    %844 = vmatpush2.msra.mxu0 %v431
    %845 = vmatprep.subr.mxu0 %v428
    %846 = vmatpush2.msra.mxu0 %v427
    %847 = vmatprep.subr.mxu0 %v424
    %848 = vmatpush2.msra.mxu0 %v423
    %849 = vmatprep.subr.mxu0 %v420
    %850 = vmatpush2.msra.mxu0 %v419
    %851 = vmatprep.subr.mxu0 %v416
    %852 = vmatpush2.msra.mxu0 %v415
    %853 = vmatprep.subr.mxu0 %v412
    %854 = vmatpush2.msra.mxu0 %v411
    %855 = vmatprep.subr.mxu0 %v408
    %856 = vmatpush2.msra.mxu0 %v407
    %857 = vmatprep.subr.mxu0 %v404
    %858 = vmatpush2.msra.mxu0 %v403
    %859 = vmatprep.subr.mxu0 %v400
    %860 = vmatpush2.msra.mxu0 %v399
    %861 = vmatprep.subr.mxu0 %v396
    %862 = vmatpush2.msra.mxu0 %v395
    %863 = vmatprep.subr.mxu0 %v392
    %864 = vmatpush2.msra.mxu0 %v391
    %865 = vmatprep.subr.mxu0 %v388
    %866 = vmatpush2.msra.mxu0 %v387
    %867 = vmatprep.mubr.f32.mxu0 %v651
    %868 = vmatmul.mubr.f32.gmra.mxu0 %v643
    %v869 = vpop.f32.mrf.mxu0
    %v870 = vadd.f32 %v799, %v869
    %v871 = vpop.f32.mrf.mxu0
    %v872 = vadd.f32 %v801, %v871
    %873 = vdwg.mxu0
    %874 = vmatprep.subr.mxu0 %v512
    %875 = vmatpush1.msra.mxu0 %v511
    %876 = vmatprep.subr.mxu0 %v508
    %877 = vmatpush1.msra.mxu0 %v507
    %878 = vmatprep.subr.mxu0 %v504
    %879 = vmatpush1.msra.mxu0 %v503
    %880 = vmatprep.subr.mxu0 %v500
    %881 = vmatpush1.msra.mxu0 %v499
    %882 = vmatprep.subr.mxu0 %v496
    %883 = vmatpush1.msra.mxu0 %v495
    %884 = vmatprep.subr.mxu0 %v492
    %885 = vmatpush1.msra.mxu0 %v491
    %886 = vmatprep.subr.mxu0 %v488
    %887 = vmatpush1.msra.mxu0 %v487
    %888 = vmatprep.subr.mxu0 %v484
    %889 = vmatpush1.msra.mxu0 %v483
    %890 = vmatprep.subr.mxu0 %v480
    %891 = vmatpush1.msra.mxu0 %v479
    %892 = vmatprep.subr.mxu0 %v476
    %893 = vmatpush1.msra.mxu0 %v475
    %894 = vmatprep.subr.mxu0 %v472
    %895 = vmatpush1.msra.mxu0 %v471
    %896 = vmatprep.subr.mxu0 %v468
    %897 = vmatpush1.msra.mxu0 %v467
    %898 = vmatprep.subr.mxu0 %v464
    %899 = vmatpush1.msra.mxu0 %v463
    %900 = vmatprep.subr.mxu0 %v460
    %901 = vmatpush1.msra.mxu0 %v459
    %902 = vmatprep.subr.mxu0 %v456
    %903 = vmatpush1.msra.mxu0 %v455
    %904 = vmatprep.subr.mxu0 %v452
    %905 = vmatpush1.msra.mxu0 %v451
    %906 = vmatprep.subr.mxu0 %v576
    %907 = vmatpush2.msra.mxu0 %v575
    %908 = vmatprep.subr.mxu0 %v572
    %909 = vmatpush2.msra.mxu0 %v571
    %910 = vmatprep.subr.mxu0 %v568
    %911 = vmatpush2.msra.mxu0 %v567
    %912 = vmatprep.subr.mxu0 %v564
    %913 = vmatpush2.msra.mxu0 %v563
    %914 = vmatprep.subr.mxu0 %v560
    %915 = vmatpush2.msra.mxu0 %v559
    %916 = vmatprep.subr.mxu0 %v556
    %917 = vmatpush2.msra.mxu0 %v555
    %918 = vmatprep.subr.mxu0 %v552
    %919 = vmatpush2.msra.mxu0 %v551
    %920 = vmatprep.subr.mxu0 %v548
    %921 = vmatpush2.msra.mxu0 %v547
    %922 = vmatprep.subr.mxu0 %v544
    %923 = vmatpush2.msra.mxu0 %v543
    %924 = vmatprep.subr.mxu0 %v540
    %925 = vmatpush2.msra.mxu0 %v539
    %926 = vmatprep.subr.mxu0 %v536
    %927 = vmatpush2.msra.mxu0 %v535
    %928 = vmatprep.subr.mxu0 %v532
    %929 = vmatpush2.msra.mxu0 %v531
    %930 = vmatprep.subr.mxu0 %v528
    %931 = vmatpush2.msra.mxu0 %v527
    %932 = vmatprep.subr.mxu0 %v524
    %933 = vmatpush2.msra.mxu0 %v523
    %934 = vmatprep.subr.mxu0 %v520
    %935 = vmatpush2.msra.mxu0 %v519
    %936 = vmatprep.subr.mxu0 %v516
    %937 = vmatpush2.msra.mxu0 %v515
    %938 = vmatprep.mubr.f32.mxu0 %v652
    %939 = vmatmul.mubr.f32.gmra.mxu0 %v650
    %v940 = vpop.f32.mrf.mxu0
    %v941 = vadd.f32 %v870, %v940
    %v942 = vpop.f32.mrf.mxu0
    %v943 = vadd.f32 %v872, %v942
    %944 = vdwg.mxu0
    %945 = vmatprep.subr.mxu0 %v130
    %946 = vmatpush1.msra.mxu0 %v129
    %947 = vmatprep.subr.mxu0 %v126
    %948 = vmatpush1.msra.mxu0 %v125
    %949 = vmatprep.subr.mxu0 %v122
    %950 = vmatpush1.msra.mxu0 %v121
    %951 = vmatprep.subr.mxu0 %v118
    %952 = vmatpush1.msra.mxu0 %v117
    %953 = vmatprep.subr.mxu0 %v114
    %954 = vmatpush1.msra.mxu0 %v113
    %955 = vmatprep.subr.mxu0 %v110
    %956 = vmatpush1.msra.mxu0 %v109
    %957 = vmatprep.subr.mxu0 %v106
    %958 = vmatpush1.msra.mxu0 %v105
    %959 = vmatprep.subr.mxu0 %v102
    %960 = vmatpush1.msra.mxu0 %v101
    %961 = vmatprep.subr.mxu0 %v98
    %962 = vmatpush1.msra.mxu0 %v97
    %963 = vmatprep.subr.mxu0 %v94
    %964 = vmatpush1.msra.mxu0 %v93
    %965 = vmatprep.subr.mxu0 %v90
    %966 = vmatpush1.msra.mxu0 %v89
    %967 = vmatprep.subr.mxu0 %v86
    %968 = vmatpush1.msra.mxu0 %v85
    %969 = vmatprep.subr.mxu0 %v82
    %970 = vmatpush1.msra.mxu0 %v81
    %971 = vmatprep.subr.mxu0 %v78
    %972 = vmatpush1.msra.mxu0 %v77
    %973 = vmatprep.subr.mxu0 %v74
    %974 = vmatpush1.msra.mxu0 %v73
    %975 = vmatprep.subr.mxu0 %v70
    %976 = vmatpush1.msra.mxu0 %v69
    %977 = vmatprep.subr.mxu0 %v194
    %978 = vmatpush2.msra.mxu0 %v193
    %979 = vmatprep.subr.mxu0 %v190
    %980 = vmatpush2.msra.mxu0 %v189
    %981 = vmatprep.subr.mxu0 %v186
    %982 = vmatpush2.msra.mxu0 %v185
    %983 = vmatprep.subr.mxu0 %v182
    %984 = vmatpush2.msra.mxu0 %v181
    %985 = vmatprep.subr.mxu0 %v178
    %986 = vmatpush2.msra.mxu0 %v177
    %987 = vmatprep.subr.mxu0 %v174
    %988 = vmatpush2.msra.mxu0 %v173
    %989 = vmatprep.subr.mxu0 %v170
    %990 = vmatpush2.msra.mxu0 %v169
    %991 = vmatprep.subr.mxu0 %v166
    %992 = vmatpush2.msra.mxu0 %v165
    %993 = vmatprep.subr.mxu0 %v162
    %994 = vmatpush2.msra.mxu0 %v161
    %995 = vmatprep.subr.mxu0 %v158
    %996 = vmatpush2.msra.mxu0 %v157
    %997 = vmatprep.subr.mxu0 %v154
    %998 = vmatpush2.msra.mxu0 %v153
    %999 = vmatprep.subr.mxu0 %v150
    %1000 = vmatpush2.msra.mxu0 %v149
    %1001 = vmatprep.subr.mxu0 %v146
    %1002 = vmatpush2.msra.mxu0 %v145
    %1003 = vmatprep.subr.mxu0 %v142
    %1004 = vmatpush2.msra.mxu0 %v141
    %1005 = vmatprep.subr.mxu0 %v138
    %1006 = vmatpush2.msra.mxu0 %v137
    %1007 = vmatprep.subr.mxu0 %v134
    %1008 = vmatpush2.msra.mxu0 %v133
    %1009 = vmatprep.mubr.f32.mxu0 %v634
    %1010 = vmatmul.mubr.f32.gmra.mxu0 %v626
    %v1011 = vpop.f32.mrf.mxu0
    %v1012 = vadd.f32 %v612, %v1011
    %v1013 = vpop.f32.mrf.mxu0
    %v1014 = vadd.f32 %v616, %v1013
    %1015 = vdwg.mxu0
    %1016 = vmatprep.subr.mxu0 %v258
    %1017 = vmatpush1.msra.mxu0 %v257
    %1018 = vmatprep.subr.mxu0 %v254
    %1019 = vmatpush1.msra.mxu0 %v253
    %1020 = vmatprep.subr.mxu0 %v250
    %1021 = vmatpush1.msra.mxu0 %v249
    %1022 = vmatprep.subr.mxu0 %v246
    %1023 = vmatpush1.msra.mxu0 %v245
    %1024 = vmatprep.subr.mxu0 %v242
    %1025 = vmatpush1.msra.mxu0 %v241
    %1026 = vmatprep.subr.mxu0 %v238
    %1027 = vmatpush1.msra.mxu0 %v237
    %1028 = vmatprep.subr.mxu0 %v234
    %1029 = vmatpush1.msra.mxu0 %v233
    %1030 = vmatprep.subr.mxu0 %v230
    %1031 = vmatpush1.msra.mxu0 %v229
    %1032 = vmatprep.subr.mxu0 %v226
    %1033 = vmatpush1.msra.mxu0 %v225
    %1034 = vmatprep.subr.mxu0 %v222
    %1035 = vmatpush1.msra.mxu0 %v221
    %1036 = vmatprep.subr.mxu0 %v218
    %1037 = vmatpush1.msra.mxu0 %v217
    %1038 = vmatprep.subr.mxu0 %v214
    %1039 = vmatpush1.msra.mxu0 %v213
    %1040 = vmatprep.subr.mxu0 %v210
    %1041 = vmatpush1.msra.mxu0 %v209
    %1042 = vmatprep.subr.mxu0 %v206
    %1043 = vmatpush1.msra.mxu0 %v205
    %1044 = vmatprep.subr.mxu0 %v202
    %1045 = vmatpush1.msra.mxu0 %v201
    %1046 = vmatprep.subr.mxu0 %v198
    %1047 = vmatpush1.msra.mxu0 %v197
    %1048 = vmatprep.subr.mxu0 %v322
    %1049 = vmatpush2.msra.mxu0 %v321
    %1050 = vmatprep.subr.mxu0 %v318
    %1051 = vmatpush2.msra.mxu0 %v317
    %1052 = vmatprep.subr.mxu0 %v314
    %1053 = vmatpush2.msra.mxu0 %v313
    %1054 = vmatprep.subr.mxu0 %v310
    %1055 = vmatpush2.msra.mxu0 %v309
    %1056 = vmatprep.subr.mxu0 %v306
    %1057 = vmatpush2.msra.mxu0 %v305
    %1058 = vmatprep.subr.mxu0 %v302
    %1059 = vmatpush2.msra.mxu0 %v301
    %1060 = vmatprep.subr.mxu0 %v298
    %1061 = vmatpush2.msra.mxu0 %v297
    %1062 = vmatprep.subr.mxu0 %v294
    %1063 = vmatpush2.msra.mxu0 %v293
    %1064 = vmatprep.subr.mxu0 %v290
    %1065 = vmatpush2.msra.mxu0 %v289
    %1066 = vmatprep.subr.mxu0 %v286
    %1067 = vmatpush2.msra.mxu0 %v285
    %1068 = vmatprep.subr.mxu0 %v282
    %1069 = vmatpush2.msra.mxu0 %v281
    %1070 = vmatprep.subr.mxu0 %v278
    %1071 = vmatpush2.msra.mxu0 %v277
    %1072 = vmatprep.subr.mxu0 %v274
    %1073 = vmatpush2.msra.mxu0 %v273
    %1074 = vmatprep.subr.mxu0 %v270
    %1075 = vmatpush2.msra.mxu0 %v269
    %1076 = vmatprep.subr.mxu0 %v266
    %1077 = vmatpush2.msra.mxu0 %v265
    %1078 = vmatprep.subr.mxu0 %v262
    %1079 = vmatpush2.msra.mxu0 %v261
    %1080 = vmatprep.mubr.f32.mxu0 %v635
    %1081 = vmatmul.mubr.f32.gmra.mxu0 %v633
    %v1082 = vpop.f32.mrf.mxu0
    %v1083 = vadd.f32 %v1012, %v1082
    %v1084 = vpop.f32.mrf.mxu0
    %v1085 = vadd.f32 %v1014, %v1084
    %1086 = vdwg.mxu0
    %1087 = vmatprep.subr.mxu0 %v386
    %1088 = vmatpush1.msra.mxu0 %v385
    %1089 = vmatprep.subr.mxu0 %v382
    %1090 = vmatpush1.msra.mxu0 %v381
    %1091 = vmatprep.subr.mxu0 %v378
    %1092 = vmatpush1.msra.mxu0 %v377
    %1093 = vmatprep.subr.mxu0 %v374
    %1094 = vmatpush1.msra.mxu0 %v373
    %1095 = vmatprep.subr.mxu0 %v370
    %1096 = vmatpush1.msra.mxu0 %v369
    %1097 = vmatprep.subr.mxu0 %v366
    %1098 = vmatpush1.msra.mxu0 %v365
    %1099 = vmatprep.subr.mxu0 %v362
    %1100 = vmatpush1.msra.mxu0 %v361
    %1101 = vmatprep.subr.mxu0 %v358
    %1102 = vmatpush1.msra.mxu0 %v357
    %1103 = vmatprep.subr.mxu0 %v354
    %1104 = vmatpush1.msra.mxu0 %v353
    %1105 = vmatprep.subr.mxu0 %v350
    %1106 = vmatpush1.msra.mxu0 %v349
    %1107 = vmatprep.subr.mxu0 %v346
    %1108 = vmatpush1.msra.mxu0 %v345
    %1109 = vmatprep.subr.mxu0 %v342
    %1110 = vmatpush1.msra.mxu0 %v341
    %1111 = vmatprep.subr.mxu0 %v338
    %1112 = vmatpush1.msra.mxu0 %v337
    %1113 = vmatprep.subr.mxu0 %v334
    %1114 = vmatpush1.msra.mxu0 %v333
    %1115 = vmatprep.subr.mxu0 %v330
    %1116 = vmatpush1.msra.mxu0 %v329
    %1117 = vmatprep.subr.mxu0 %v326
    %1118 = vmatpush1.msra.mxu0 %v325
    %1119 = vmatprep.subr.mxu0 %v450
    %1120 = vmatpush2.msra.mxu0 %v449
    %1121 = vmatprep.subr.mxu0 %v446
    %1122 = vmatpush2.msra.mxu0 %v445
    %1123 = vmatprep.subr.mxu0 %v442
    %1124 = vmatpush2.msra.mxu0 %v441
    %1125 = vmatprep.subr.mxu0 %v438
    %1126 = vmatpush2.msra.mxu0 %v437
    %1127 = vmatprep.subr.mxu0 %v434
    %1128 = vmatpush2.msra.mxu0 %v433
    %1129 = vmatprep.subr.mxu0 %v430
    %1130 = vmatpush2.msra.mxu0 %v429
    %1131 = vmatprep.subr.mxu0 %v426
    %1132 = vmatpush2.msra.mxu0 %v425
    %1133 = vmatprep.subr.mxu0 %v422
    %1134 = vmatpush2.msra.mxu0 %v421
    %1135 = vmatprep.subr.mxu0 %v418
    %1136 = vmatpush2.msra.mxu0 %v417
    %1137 = vmatprep.subr.mxu0 %v414
    %1138 = vmatpush2.msra.mxu0 %v413
    %1139 = vmatprep.subr.mxu0 %v410
    %1140 = vmatpush2.msra.mxu0 %v409
    %1141 = vmatprep.subr.mxu0 %v406
    %1142 = vmatpush2.msra.mxu0 %v405
    %1143 = vmatprep.subr.mxu0 %v402
    %1144 = vmatpush2.msra.mxu0 %v401
    %1145 = vmatprep.subr.mxu0 %v398
    %1146 = vmatpush2.msra.mxu0 %v397
    %1147 = vmatprep.subr.mxu0 %v394
    %1148 = vmatpush2.msra.mxu0 %v393
    %1149 = vmatprep.subr.mxu0 %v390
    %1150 = vmatpush2.msra.mxu0 %v389
    %1151 = vmatprep.mubr.f32.mxu0 %v651
    %1152 = vmatmul.mubr.f32.gmra.mxu0 %v643
    %v1153 = vpop.f32.mrf.mxu0
    %v1154 = vadd.f32 %v1083, %v1153
    %v1155 = vpop.f32.mrf.mxu0
    %v1156 = vadd.f32 %v1085, %v1155
    %1157 = vdwg.mxu0
    %1158 = vmatprep.subr.mxu0 %v514
    %1159 = vmatpush1.msra.mxu0 %v513
    %1160 = vmatprep.subr.mxu0 %v510
    %1161 = vmatpush1.msra.mxu0 %v509
    %1162 = vmatprep.subr.mxu0 %v506
    %1163 = vmatpush1.msra.mxu0 %v505
    %1164 = vmatprep.subr.mxu0 %v502
    %1165 = vmatpush1.msra.mxu0 %v501
    %1166 = vmatprep.subr.mxu0 %v498
    %1167 = vmatpush1.msra.mxu0 %v497
    %1168 = vmatprep.subr.mxu0 %v494
    %1169 = vmatpush1.msra.mxu0 %v493
    %1170 = vmatprep.subr.mxu0 %v490
    %1171 = vmatpush1.msra.mxu0 %v489
    %1172 = vmatprep.subr.mxu0 %v486
    %1173 = vmatpush1.msra.mxu0 %v485
    %1174 = vmatprep.subr.mxu0 %v482
    %1175 = vmatpush1.msra.mxu0 %v481
    %1176 = vmatprep.subr.mxu0 %v478
    %1177 = vmatpush1.msra.mxu0 %v477
    %1178 = vmatprep.subr.mxu0 %v474
    %1179 = vmatpush1.msra.mxu0 %v473
    %1180 = vmatprep.subr.mxu0 %v470
    %1181 = vmatpush1.msra.mxu0 %v469
    %1182 = vmatprep.subr.mxu0 %v466
    %1183 = vmatpush1.msra.mxu0 %v465
    %1184 = vmatprep.subr.mxu0 %v462
    %1185 = vmatpush1.msra.mxu0 %v461
    %1186 = vmatprep.subr.mxu0 %v458
    %1187 = vmatpush1.msra.mxu0 %v457
    %1188 = vmatprep.subr.mxu0 %v454
    %1189 = vmatpush1.msra.mxu0 %v453
    %1190 = vmatprep.subr.mxu0 %v578
    %1191 = vmatpush2.msra.mxu0 %v577
    %1192 = vmatprep.subr.mxu0 %v574
    %1193 = vmatpush2.msra.mxu0 %v573
    %1194 = vmatprep.subr.mxu0 %v570
    %1195 = vmatpush2.msra.mxu0 %v569
    %1196 = vmatprep.subr.mxu0 %v566
    %1197 = vmatpush2.msra.mxu0 %v565
    %1198 = vmatprep.subr.mxu0 %v562
    %1199 = vmatpush2.msra.mxu0 %v561
    %1200 = vmatprep.subr.mxu0 %v558
    %1201 = vmatpush2.msra.mxu0 %v557
    %1202 = vmatprep.subr.mxu0 %v554
    %1203 = vmatpush2.msra.mxu0 %v553
    %1204 = vmatprep.subr.mxu0 %v550
    %1205 = vmatpush2.msra.mxu0 %v549
    %1206 = vmatprep.subr.mxu0 %v546
    %1207 = vmatpush2.msra.mxu0 %v545
    %1208 = vmatprep.subr.mxu0 %v542
    %1209 = vmatpush2.msra.mxu0 %v541
    %1210 = vmatprep.subr.mxu0 %v538
    %1211 = vmatpush2.msra.mxu0 %v537
    %1212 = vmatprep.subr.mxu0 %v534
    %1213 = vmatpush2.msra.mxu0 %v533
    %1214 = vmatprep.subr.mxu0 %v530
    %1215 = vmatpush2.msra.mxu0 %v529
    %1216 = vmatprep.subr.mxu0 %v526
    %1217 = vmatpush2.msra.mxu0 %v525
    %1218 = vmatprep.subr.mxu0 %v522
    %1219 = vmatpush2.msra.mxu0 %v521
    %1220 = vmatprep.subr.mxu0 %v518
    %1221 = vmatpush2.msra.mxu0 %v517
    %1222 = vmatprep.mubr.f32.mxu0 %v652
    %1223 = vmatmul.mubr.f32.gmra.mxu0 %v650
    %v1224 = vpop.f32.mrf.mxu0
    %v1225 = vadd.f32 %v1154, %v1224
    %v1226 = vpop.f32.mrf.mxu0
    %v1227 = vadd.f32 %v1156, %v1226
    %1228 = vdwg.mxu0
    %v1229 = vmax.f32 %v941, 0.0
    %v1230 = vmax.f32 %v943, 0.0
    %v1231 = vmax.f32 %v1225, 0.0
    %v1232 = vmax.f32 %v1227, 0.0
    %v1233 = vld [vmem:[#allocation5] sm:$0xff]
    %v1234 = vld [vmem:[#allocation5 + $0x8] sm:$0xff]
    %v1235 = vld [vmem:[#allocation5 + $0x10] sm:$0xff]
    %v1236 = vld [vmem:[#allocation5 + $0x18] sm:$0xff]
    %v1237 = vld [vmem:[#allocation5 + $0x20] sm:$0xff]
    %v1238 = vld [vmem:[#allocation5 + $0x28] sm:$0xff]
    %v1239 = vld [vmem:[#allocation5 + $0x30] sm:$0xff]
    %v1240 = vld [vmem:[#allocation5 + $0x38] sm:$0xff]
    %v1241 = vld [vmem:[#allocation5 + $0x40] sm:$0xff]
    %v1242 = vld [vmem:[#allocation5 + $0x48] sm:$0xff]
    %v1243 = vld [vmem:[#allocation5 + $0x50] sm:$0xff]
    %v1244 = vld [vmem:[#allocation5 + $0x58] sm:$0xff]
    %v1245 = vld [vmem:[#allocation5 + $0x60] sm:$0xff]
    %v1246 = vld [vmem:[#allocation5 + $0x68] sm:$0xff]
    %v1247 = vld [vmem:[#allocation5 + $0x70] sm:$0xff]
    %v1248 = vld [vmem:[#allocation5 + $0x78] sm:$0xff]
    %v1249 = vld [vmem:[#allocation5 + $0x80] sm:$0xff]
    %v1250 = vld [vmem:[#allocation5 + $0x88] sm:$0xff]
    %v1251 = vld [vmem:[#allocation5 + $0x90] sm:$0xff]
    %v1252 = vld [vmem:[#allocation5 + $0x98] sm:$0xff]
    %v1253 = vld [vmem:[#allocation5 + $0xa0] sm:$0xff]
    %v1254 = vld [vmem:[#allocation5 + $0xa8] sm:$0xff]
    %v1255 = vld [vmem:[#allocation5 + $0xb0] sm:$0xff]
    %v1256 = vld [vmem:[#allocation5 + $0xb8] sm:$0xff]
    %v1257 = vld [vmem:[#allocation5 + $0xc0] sm:$0xff]
    %v1258 = vld [vmem:[#allocation5 + $0xc8] sm:$0xff]
    %v1259 = vld [vmem:[#allocation5 + $0xd0] sm:$0xff]
    %v1260 = vld [vmem:[#allocation5 + $0xd8] sm:$0xff]
    %v1261 = vld [vmem:[#allocation5 + $0xe0] sm:$0xff]
    %v1262 = vld [vmem:[#allocation5 + $0xe8] sm:$0xff]
    %v1263 = vld [vmem:[#allocation5 + $0xf0] sm:$0xff]
    %v1264 = vld [vmem:[#allocation5 + $0xf8] sm:$0xff]
    %v1265 = vld [vmem:[#allocation5 + $0x100] sm:$0xff]
    %v1266 = vld [vmem:[#allocation5 + $0x108] sm:$0xff]
    %v1267 = vld [vmem:[#allocation5 + $0x110] sm:$0xff]
    %v1268 = vld [vmem:[#allocation5 + $0x118] sm:$0xff]
    %v1269 = vld [vmem:[#allocation5 + $0x120] sm:$0xff]
    %v1270 = vld [vmem:[#allocation5 + $0x128] sm:$0xff]
    %v1271 = vld [vmem:[#allocation5 + $0x130] sm:$0xff]
    %v1272 = vld [vmem:[#allocation5 + $0x138] sm:$0xff]
    %v1273 = vld [vmem:[#allocation5 + $0x140] sm:$0xff]
    %v1274 = vld [vmem:[#allocation5 + $0x148] sm:$0xff]
    %v1275 = vld [vmem:[#allocation5 + $0x150] sm:$0xff]
    %v1276 = vld [vmem:[#allocation5 + $0x158] sm:$0xff]
    %v1277 = vld [vmem:[#allocation5 + $0x160] sm:$0xff]
    %v1278 = vld [vmem:[#allocation5 + $0x168] sm:$0xff]
    %v1279 = vld [vmem:[#allocation5 + $0x170] sm:$0xff]
    %v1280 = vld [vmem:[#allocation5 + $0x178] sm:$0xff]
    %v1281 = vld [vmem:[#allocation5 + $0x180] sm:$0xff]
    %v1282 = vld [vmem:[#allocation5 + $0x188] sm:$0xff]
    %v1283 = vld [vmem:[#allocation5 + $0x190] sm:$0xff]
    %v1284 = vld [vmem:[#allocation5 + $0x198] sm:$0xff]
    %v1285 = vld [vmem:[#allocation5 + $0x1a0] sm:$0xff]
    %v1286 = vld [vmem:[#allocation5 + $0x1a8] sm:$0xff]
    %v1287 = vld [vmem:[#allocation5 + $0x1b0] sm:$0xff]
    %v1288 = vld [vmem:[#allocation5 + $0x1b8] sm:$0xff]
    %v1289 = vld [vmem:[#allocation5 + $0x1c0] sm:$0xff]
    %v1290 = vld [vmem:[#allocation5 + $0x1c8] sm:$0xff]
    %v1291 = vld [vmem:[#allocation5 + $0x1d0] sm:$0xff]
    %v1292 = vld [vmem:[#allocation5 + $0x1d8] sm:$0xff]
    %v1293 = vld [vmem:[#allocation5 + $0x1e0] sm:$0xff]
    %v1294 = vld [vmem:[#allocation5 + $0x1e8] sm:$0xff]
    %v1295 = vld [vmem:[#allocation5 + $0x1f0] sm:$0xff]
    %v1296 = vld [vmem:[#allocation5 + $0x1f8] sm:$0xff]
    %v1297 = vld [vmem:[#allocation5 + $0x200] sm:$0xff]
    %v1298 = vld [vmem:[#allocation5 + $0x208] sm:$0xff]
    %v1299 = vld [vmem:[#allocation5 + $0x210] sm:$0xff]
    %v1300 = vld [vmem:[#allocation5 + $0x218] sm:$0xff]
    %v1301 = vld [vmem:[#allocation5 + $0x220] sm:$0xff]
    %v1302 = vld [vmem:[#allocation5 + $0x228] sm:$0xff]
    %v1303 = vld [vmem:[#allocation5 + $0x230] sm:$0xff]
    %v1304 = vld [vmem:[#allocation5 + $0x238] sm:$0xff]
    %v1305 = vld [vmem:[#allocation5 + $0x240] sm:$0xff]
    %v1306 = vld [vmem:[#allocation5 + $0x248] sm:$0xff]
    %v1307 = vld [vmem:[#allocation5 + $0x250] sm:$0xff]
    %v1308 = vld [vmem:[#allocation5 + $0x258] sm:$0xff]
    %v1309 = vld [vmem:[#allocation5 + $0x260] sm:$0xff]
    %v1310 = vld [vmem:[#allocation5 + $0x268] sm:$0xff]
    %v1311 = vld [vmem:[#allocation5 + $0x270] sm:$0xff]
    %v1312 = vld [vmem:[#allocation5 + $0x278] sm:$0xff]
    %v1313 = vld [vmem:[#allocation5 + $0x280] sm:$0xff]
    %v1314 = vld [vmem:[#allocation5 + $0x288] sm:$0xff]
    %v1315 = vld [vmem:[#allocation5 + $0x290] sm:$0xff]
    %v1316 = vld [vmem:[#allocation5 + $0x298] sm:$0xff]
    %v1317 = vld [vmem:[#allocation5 + $0x2a0] sm:$0xff]
    %v1318 = vld [vmem:[#allocation5 + $0x2a8] sm:$0xff]
    %v1319 = vld [vmem:[#allocation5 + $0x2b0] sm:$0xff]
    %v1320 = vld [vmem:[#allocation5 + $0x2b8] sm:$0xff]
    %v1321 = vld [vmem:[#allocation5 + $0x2c0] sm:$0xff]
    %v1322 = vld [vmem:[#allocation5 + $0x2c8] sm:$0xff]
    %v1323 = vld [vmem:[#allocation5 + $0x2d0] sm:$0xff]
    %v1324 = vld [vmem:[#allocation5 + $0x2d8] sm:$0xff]
    %v1325 = vld [vmem:[#allocation5 + $0x2e0] sm:$0xff]
    %v1326 = vld [vmem:[#allocation5 + $0x2e8] sm:$0xff]
    %v1327 = vld [vmem:[#allocation5 + $0x2f0] sm:$0xff]
    %v1328 = vld [vmem:[#allocation5 + $0x2f8] sm:$0xff]
    %v1329 = vld [vmem:[#allocation5 + $0x300] sm:$0xff]
    %v1330 = vld [vmem:[#allocation5 + $0x308] sm:$0xff]
    %v1331 = vld [vmem:[#allocation5 + $0x310] sm:$0xff]
    %v1332 = vld [vmem:[#allocation5 + $0x318] sm:$0xff]
    %v1333 = vld [vmem:[#allocation5 + $0x320] sm:$0xff]
    %v1334 = vld [vmem:[#allocation5 + $0x328] sm:$0xff]
    %v1335 = vld [vmem:[#allocation5 + $0x330] sm:$0xff]
    %v1336 = vld [vmem:[#allocation5 + $0x338] sm:$0xff]
    %v1337 = vld [vmem:[#allocation5 + $0x340] sm:$0xff]
    %v1338 = vld [vmem:[#allocation5 + $0x348] sm:$0xff]
    %v1339 = vld [vmem:[#allocation5 + $0x350] sm:$0xff]
    %v1340 = vld [vmem:[#allocation5 + $0x358] sm:$0xff]
    %v1341 = vld [vmem:[#allocation5 + $0x360] sm:$0xff]
    %v1342 = vld [vmem:[#allocation5 + $0x368] sm:$0xff]
    %v1343 = vld [vmem:[#allocation5 + $0x370] sm:$0xff]
    %v1344 = vld [vmem:[#allocation5 + $0x378] sm:$0xff]
    %v1345 = vld [vmem:[#allocation5 + $0x380] sm:$0xff]
    %v1346 = vld [vmem:[#allocation5 + $0x388] sm:$0xff]
    %v1347 = vld [vmem:[#allocation5 + $0x390] sm:$0xff]
    %v1348 = vld [vmem:[#allocation5 + $0x398] sm:$0xff]
    %v1349 = vld [vmem:[#allocation5 + $0x3a0] sm:$0xff]
    %v1350 = vld [vmem:[#allocation5 + $0x3a8] sm:$0xff]
    %v1351 = vld [vmem:[#allocation5 + $0x3b0] sm:$0xff]
    %v1352 = vld [vmem:[#allocation5 + $0x3b8] sm:$0xff]
    %v1353 = vld [vmem:[#allocation5 + $0x3c0] sm:$0xff]
    %v1354 = vld [vmem:[#allocation5 + $0x3c8] sm:$0xff]
    %v1355 = vld [vmem:[#allocation5 + $0x3d0] sm:$0xff]
    %v1356 = vld [vmem:[#allocation5 + $0x3d8] sm:$0xff]
    %v1357 = vld [vmem:[#allocation5 + $0x3e0] sm:$0xff]
    %v1358 = vld [vmem:[#allocation5 + $0x3e8] sm:$0xff]
    %v1359 = vld [vmem:[#allocation5 + $0x3f0] sm:$0xff]
    %v1360 = vld [vmem:[#allocation5 + $0x3f8] sm:$0xff]
    %v1361 = vlaneseq
    %v1362 = vshrl.u32 %v1361, 7
    %v1363 = vsub.s32 1, %v1362
    %v1364 = vrot.slane %v65, %v1363
    %v1365 = vlaneseq
    %v1366 = vshrl.u32 %v1365, 7
    %v1367 = vsub.s32 5, %v1366
    %v1368 = vrot.slane %v65, %v1367
    %v1371 = vlaneseq
    %v1372 = vshrl.u32 %v1371, 7
    %v1373 = vsub.s32 1, %v1372
    %v1374 = vrot.slane %v1364, %v1373
    %v1375 = vlaneseq
    %v1376 = vshrl.u32 %v1375, 7
    %v1377 = vsub.s32 1, %v1376
    %v1378 = vrot.slane %v1368, %v1377
    %1379 = vmatprep.subr.mxu0 %v1264
    %1380 = vmatpush1.msra.mxu0 %v1263
    %1381 = vmatprep.subr.mxu0 %v1262
    %1382 = vmatpush1.msra.mxu0 %v1261
    %1383 = vmatprep.subr.mxu0 %v1260
    %1384 = vmatpush1.msra.mxu0 %v1259
    %1385 = vmatprep.subr.mxu0 %v1258
    %1386 = vmatpush1.msra.mxu0 %v1257
    %1387 = vmatprep.subr.mxu0 %v1256
    %1388 = vmatpush1.msra.mxu0 %v1255
    %1389 = vmatprep.subr.mxu0 %v1254
    %1390 = vmatpush1.msra.mxu0 %v1253
    %1391 = vmatprep.subr.mxu0 %v1252
    %1392 = vmatpush1.msra.mxu0 %v1251
    %1393 = vmatprep.subr.mxu0 %v1250
    %1394 = vmatpush1.msra.mxu0 %v1249
    %1395 = vmatprep.subr.mxu0 %v1248
    %1396 = vmatpush1.msra.mxu0 %v1247
    %1397 = vmatprep.subr.mxu0 %v1246
    %1398 = vmatpush1.msra.mxu0 %v1245
    %1399 = vmatprep.subr.mxu0 %v1244
    %1400 = vmatpush1.msra.mxu0 %v1243
    %1401 = vmatprep.subr.mxu0 %v1242
    %1402 = vmatpush1.msra.mxu0 %v1241
    %1403 = vmatprep.subr.mxu0 %v1240
    %1404 = vmatpush1.msra.mxu0 %v1239
    %1405 = vmatprep.subr.mxu0 %v1238
    %1406 = vmatpush1.msra.mxu0 %v1237
    %1407 = vmatprep.subr.mxu0 %v1236
    %1408 = vmatpush1.msra.mxu0 %v1235
    %1409 = vmatprep.subr.mxu0 %v1234
    %1410 = vmatpush1.msra.mxu0 %v1233
    %1411 = vmatprep.subr.mxu0 %v1296
    %1412 = vmatpush2.msra.mxu0 %v1295
    %1413 = vmatprep.subr.mxu0 %v1294
    %1414 = vmatpush2.msra.mxu0 %v1293
    %1415 = vmatprep.subr.mxu0 %v1292
    %1416 = vmatpush2.msra.mxu0 %v1291
    %1417 = vmatprep.subr.mxu0 %v1290
    %1418 = vmatpush2.msra.mxu0 %v1289
    %1419 = vmatprep.subr.mxu0 %v1288
    %1420 = vmatpush2.msra.mxu0 %v1287
    %1421 = vmatprep.subr.mxu0 %v1286
    %1422 = vmatpush2.msra.mxu0 %v1285
    %1423 = vmatprep.subr.mxu0 %v1284
    %1424 = vmatpush2.msra.mxu0 %v1283
    %1425 = vmatprep.subr.mxu0 %v1282
    %1426 = vmatpush2.msra.mxu0 %v1281
    %1427 = vmatprep.subr.mxu0 %v1280
    %1428 = vmatpush2.msra.mxu0 %v1279
    %1429 = vmatprep.subr.mxu0 %v1278
    %1430 = vmatpush2.msra.mxu0 %v1277
    %1431 = vmatprep.subr.mxu0 %v1276
    %1432 = vmatpush2.msra.mxu0 %v1275
    %1433 = vmatprep.subr.mxu0 %v1274
    %1434 = vmatpush2.msra.mxu0 %v1273
    %1435 = vmatprep.subr.mxu0 %v1272
    %1436 = vmatpush2.msra.mxu0 %v1271
    %1437 = vmatprep.subr.mxu0 %v1270
    %1438 = vmatpush2.msra.mxu0 %v1269
    %1439 = vmatprep.subr.mxu0 %v1268
    %1440 = vmatpush2.msra.mxu0 %v1267
    %1441 = vmatprep.subr.mxu0 %v1266
    %1442 = vmatpush2.msra.mxu0 %v1265
    %1443 = vmatprep.mubr.f32.mxu0 %v1230
    %1444 = vmatmul.mubr.f32.gmra.mxu0 %v1229
    %v1445 = vpop.f32.mrf.mxu0
    %v1446 = vadd.f32 %v1374, %v1445
    %v1447 = vpop.f32.mrf.mxu0
    %v1448 = vadd.f32 %v1378, %v1447
    %1449 = vdwg.mxu0
    %1450 = vmatprep.subr.mxu0 %v1328
    %1451 = vmatpush1.msra.mxu0 %v1327
    %1452 = vmatprep.subr.mxu0 %v1326
    %1453 = vmatpush1.msra.mxu0 %v1325
    %1454 = vmatprep.subr.mxu0 %v1324
    %1455 = vmatpush1.msra.mxu0 %v1323
    %1456 = vmatprep.subr.mxu0 %v1322
    %1457 = vmatpush1.msra.mxu0 %v1321
    %1458 = vmatprep.subr.mxu0 %v1320
    %1459 = vmatpush1.msra.mxu0 %v1319
    %1460 = vmatprep.subr.mxu0 %v1318
    %1461 = vmatpush1.msra.mxu0 %v1317
    %1462 = vmatprep.subr.mxu0 %v1316
    %1463 = vmatpush1.msra.mxu0 %v1315
    %1464 = vmatprep.subr.mxu0 %v1314
    %1465 = vmatpush1.msra.mxu0 %v1313
    %1466 = vmatprep.subr.mxu0 %v1312
    %1467 = vmatpush1.msra.mxu0 %v1311
    %1468 = vmatprep.subr.mxu0 %v1310
    %1469 = vmatpush1.msra.mxu0 %v1309
    %1470 = vmatprep.subr.mxu0 %v1308
    %1471 = vmatpush1.msra.mxu0 %v1307
    %1472 = vmatprep.subr.mxu0 %v1306
    %1473 = vmatpush1.msra.mxu0 %v1305
    %1474 = vmatprep.subr.mxu0 %v1304
    %1475 = vmatpush1.msra.mxu0 %v1303
    %1476 = vmatprep.subr.mxu0 %v1302
    %1477 = vmatpush1.msra.mxu0 %v1301
    %1478 = vmatprep.subr.mxu0 %v1300
    %1479 = vmatpush1.msra.mxu0 %v1299
    %1480 = vmatprep.subr.mxu0 %v1298
    %1481 = vmatpush1.msra.mxu0 %v1297
    %1482 = vmatprep.subr.mxu0 %v1360
    %1483 = vmatpush2.msra.mxu0 %v1359
    %1484 = vmatprep.subr.mxu0 %v1358
    %1485 = vmatpush2.msra.mxu0 %v1357
    %1486 = vmatprep.subr.mxu0 %v1356
    %1487 = vmatpush2.msra.mxu0 %v1355
    %1488 = vmatprep.subr.mxu0 %v1354
    %1489 = vmatpush2.msra.mxu0 %v1353
    %1490 = vmatprep.subr.mxu0 %v1352
    %1491 = vmatpush2.msra.mxu0 %v1351
    %1492 = vmatprep.subr.mxu0 %v1350
    %1493 = vmatpush2.msra.mxu0 %v1349
    %1494 = vmatprep.subr.mxu0 %v1348
    %1495 = vmatpush2.msra.mxu0 %v1347
    %1496 = vmatprep.subr.mxu0 %v1346
    %1497 = vmatpush2.msra.mxu0 %v1345
    %1498 = vmatprep.subr.mxu0 %v1344
    %1499 = vmatpush2.msra.mxu0 %v1343
    %1500 = vmatprep.subr.mxu0 %v1342
    %1501 = vmatpush2.msra.mxu0 %v1341
    %1502 = vmatprep.subr.mxu0 %v1340
    %1503 = vmatpush2.msra.mxu0 %v1339
    %1504 = vmatprep.subr.mxu0 %v1338
    %1505 = vmatpush2.msra.mxu0 %v1337
    %1506 = vmatprep.subr.mxu0 %v1336
    %1507 = vmatpush2.msra.mxu0 %v1335
    %1508 = vmatprep.subr.mxu0 %v1334
    %1509 = vmatpush2.msra.mxu0 %v1333
    %1510 = vmatprep.subr.mxu0 %v1332
    %1511 = vmatpush2.msra.mxu0 %v1331
    %1512 = vmatprep.subr.mxu0 %v1330
    %1513 = vmatpush2.msra.mxu0 %v1329
    %1514 = vmatprep.mubr.f32.mxu0 %v1232
    %1515 = vmatmul.mubr.f32.gmra.mxu0 %v1231
    %v1516 = vpop.f32.mrf.mxu0
    %v1517 = vadd.f32 %v1446, %v1516
    %v1518 = vpop.f32.mrf.mxu0
    %v1519 = vadd.f32 %v1448, %v1518
    %1520 = vdwg.mxu0
    %v1521 = vmax.f32 %v1517, 0.0
    %v1522 = vmax.f32 %v1519, 0.0
    %v1523 = vld [vmem:[%s3] sm:$0xff]
    %v1524 = vld [vmem:[%s3 + $0x8] sm:$0xff]
    %v1525 = vld [vmem:[%s3 + $0x10] sm:$0xff]
    %v1526 = vld [vmem:[%s3 + $0x18] sm:$0xff]
    %v1527 = vld [vmem:[%s3 + $0x20] sm:$0xff]
    %v1528 = vld [vmem:[%s3 + $0x28] sm:$0xff]
    %v1529 = vld [vmem:[%s3 + $0x30] sm:$0xff]
    %v1530 = vld [vmem:[%s3 + $0x38] sm:$0xff]
    %v1531 = vld [vmem:[%s3 + $0x40] sm:$0xff]
    %v1532 = vld [vmem:[%s3 + $0x48] sm:$0xff]
    %v1533 = vld [vmem:[%s3 + $0x50] sm:$0xff]
    %v1534 = vld [vmem:[%s3 + $0x58] sm:$0xff]
    %v1535 = vld [vmem:[%s3 + $0x60] sm:$0xff]
    %v1536 = vld [vmem:[%s3 + $0x68] sm:$0xff]
    %v1537 = vld [vmem:[%s3 + $0x70] sm:$0xff]
    %v1538 = vld [vmem:[%s3 + $0x78] sm:$0xff]
    %v1539 = vld [vmem:[%s3 + $0x80] sm:$0xff]
    %v1540 = vld [vmem:[%s3 + $0x88] sm:$0xff]
    %v1541 = vld [vmem:[%s3 + $0x90] sm:$0xff]
    %v1542 = vld [vmem:[%s3 + $0x98] sm:$0xff]
    %v1543 = vld [vmem:[%s3 + $0xa0] sm:$0xff]
    %v1544 = vld [vmem:[%s3 + $0xa8] sm:$0xff]
    %v1545 = vld [vmem:[%s3 + $0xb0] sm:$0xff]
    %v1546 = vld [vmem:[%s3 + $0xb8] sm:$0xff]
    %v1547 = vld [vmem:[%s3 + $0xc0] sm:$0xff]
    %v1548 = vld [vmem:[%s3 + $0xc8] sm:$0xff]
    %v1549 = vld [vmem:[%s3 + $0xd0] sm:$0xff]
    %v1550 = vld [vmem:[%s3 + $0xd8] sm:$0xff]
    %v1551 = vld [vmem:[%s3 + $0xe0] sm:$0xff]
    %v1552 = vld [vmem:[%s3 + $0xe8] sm:$0xff]
    %v1553 = vld [vmem:[%s3 + $0xf0] sm:$0xff]
    %v1554 = vld [vmem:[%s3 + $0xf8] sm:$0xff]
    %v1555 = vld [vmem:[%s4] sm:$0xff]
    %v1556 = vld [vmem:[%s4 + $0x8] sm:$0xff]
    %v1557 = vld [vmem:[%s4 + $0x10] sm:$0xff]
    %v1558 = vld [vmem:[%s4 + $0x18] sm:$0xff]
    %v1559 = vld [vmem:[%s4 + $0x20] sm:$0xff]
    %v1560 = vld [vmem:[%s4 + $0x28] sm:$0xff]
    %v1561 = vld [vmem:[%s4 + $0x30] sm:$0xff]
    %v1562 = vld [vmem:[%s4 + $0x38] sm:$0xff]
    %v1563 = vld [vmem:[%s4 + $0x40] sm:$0xff]
    %v1564 = vld [vmem:[%s4 + $0x48] sm:$0xff]
    %v1565 = vld [vmem:[%s4 + $0x50] sm:$0xff]
    %v1566 = vld [vmem:[%s4 + $0x58] sm:$0xff]
    %v1567 = vld [vmem:[%s4 + $0x60] sm:$0xff]
    %v1568 = vld [vmem:[%s4 + $0x68] sm:$0xff]
    %v1569 = vld [vmem:[%s4 + $0x70] sm:$0xff]
    %v1570 = vld [vmem:[%s4 + $0x78] sm:$0xff]
    %v1571 = vld [vmem:[%s4 + $0x80] sm:$0xff]
    %v1572 = vld [vmem:[%s4 + $0x88] sm:$0xff]
    %v1573 = vld [vmem:[%s4 + $0x90] sm:$0xff]
    %v1574 = vld [vmem:[%s4 + $0x98] sm:$0xff]
    %v1575 = vld [vmem:[%s4 + $0xa0] sm:$0xff]
    %v1576 = vld [vmem:[%s4 + $0xa8] sm:$0xff]
    %v1577 = vld [vmem:[%s4 + $0xb0] sm:$0xff]
    %v1578 = vld [vmem:[%s4 + $0xb8] sm:$0xff]
    %v1579 = vld [vmem:[%s4 + $0xc0] sm:$0xff]
    %v1580 = vld [vmem:[%s4 + $0xc8] sm:$0xff]
    %v1581 = vld [vmem:[%s4 + $0xd0] sm:$0xff]
    %v1582 = vld [vmem:[%s4 + $0xd8] sm:$0xff]
    %v1583 = vld [vmem:[%s4 + $0xe0] sm:$0xff]
    %v1584 = vld [vmem:[%s4 + $0xe8] sm:$0xff]
    %v1585 = vld [vmem:[%s4 + $0xf0] sm:$0xff]
    %v1586 = vld [vmem:[%s4 + $0xf8] sm:$0xff]
    %v1589 = vrot.slane %v1521, 1
    %v1590 = vrot.slane %v1522, 1
    %1593 = vmatprep.subr.mxu0 0.0
    %1594 = vmatpush1.msra.mxu0 %v1570
    %1595 = vmatprep.subr.mxu0 0.0
    %1596 = vmatpush1.msra.mxu0 %v1569
    %1597 = vmatprep.subr.mxu0 0.0
    %1598 = vmatpush1.msra.mxu0 %v1568
    %1599 = vmatprep.subr.mxu0 0.0
    %1600 = vmatpush1.msra.mxu0 %v1567
    %1601 = vmatprep.subr.mxu0 0.0
    %1602 = vmatpush1.msra.mxu0 %v1566
    %1603 = vmatprep.subr.mxu0 0.0
    %1604 = vmatpush1.msra.mxu0 %v1565
    %1605 = vmatprep.subr.mxu0 0.0
    %1606 = vmatpush1.msra.mxu0 %v1564
    %1607 = vmatprep.subr.mxu0 0.0
    %1608 = vmatpush1.msra.mxu0 %v1563
    %1609 = vmatprep.subr.mxu0 0.0
    %1610 = vmatpush1.msra.mxu0 %v1562
    %1611 = vmatprep.subr.mxu0 0.0
    %1612 = vmatpush1.msra.mxu0 %v1561
    %1613 = vmatprep.subr.mxu0 0.0
    %1614 = vmatpush1.msra.mxu0 %v1560
    %1615 = vmatprep.subr.mxu0 0.0
    %1616 = vmatpush1.msra.mxu0 %v1559
    %1617 = vmatprep.subr.mxu0 0.0
    %1618 = vmatpush1.msra.mxu0 %v1558
    %1619 = vmatprep.subr.mxu0 0.0
    %1620 = vmatpush1.msra.mxu0 %v1557
    %1621 = vmatprep.subr.mxu0 0.0
    %1622 = vmatpush1.msra.mxu0 %v1556
    %1623 = vmatprep.subr.mxu0 0.0
    %1624 = vmatpush1.msra.mxu0 %v1555
    %1625 = vmatprep.subr.mxu0 0.0
    %1626 = vmatpush2.msra.mxu0 %v1586
    %1627 = vmatprep.subr.mxu0 0.0
    %1628 = vmatpush2.msra.mxu0 %v1585
    %1629 = vmatprep.subr.mxu0 0.0
    %1630 = vmatpush2.msra.mxu0 %v1584
    %1631 = vmatprep.subr.mxu0 0.0
    %1632 = vmatpush2.msra.mxu0 %v1583
    %1633 = vmatprep.subr.mxu0 0.0
    %1634 = vmatpush2.msra.mxu0 %v1582
    %1635 = vmatprep.subr.mxu0 0.0
    %1636 = vmatpush2.msra.mxu0 %v1581
    %1637 = vmatprep.subr.mxu0 0.0
    %1638 = vmatpush2.msra.mxu0 %v1580
    %1639 = vmatprep.subr.mxu0 0.0
    %1640 = vmatpush2.msra.mxu0 %v1579
    %1641 = vmatprep.subr.mxu0 0.0
    %1642 = vmatpush2.msra.mxu0 %v1578
    %1643 = vmatprep.subr.mxu0 0.0
    %1644 = vmatpush2.msra.mxu0 %v1577
    %1645 = vmatprep.subr.mxu0 0.0
    %1646 = vmatpush2.msra.mxu0 %v1576
    %1647 = vmatprep.subr.mxu0 0.0
    %1648 = vmatpush2.msra.mxu0 %v1575
    %1649 = vmatprep.subr.mxu0 0.0
    %1650 = vmatpush2.msra.mxu0 %v1574
    %1651 = vmatprep.subr.mxu0 0.0
    %1652 = vmatpush2.msra.mxu0 %v1573
    %1653 = vmatprep.subr.mxu0 0.0
    %1654 = vmatpush2.msra.mxu0 %v1572
    %1655 = vmatprep.subr.mxu0 0.0
    %1656 = vmatpush2.msra.mxu0 %v1571
    %1657 = vmatprep.mubr.f32.mxu0 %v1590
    %1658 = vmatmul.mubr.f32.gmra.mxu0 %v1589
    %v1659 = vpop.f32.mrf.mxu0
    %v1660 = vadd.f32 0.0, %v1659
    %v1661 = vpop.f32.mrf.mxu0
    %1662 = vdwg.mxu0
    %1663 = vmatprep.subr.mxu0 0.0
    %1664 = vmatpush1.msra.mxu0 %v1538
    %1665 = vmatprep.subr.mxu0 0.0
    %1666 = vmatpush1.msra.mxu0 %v1537
    %1667 = vmatprep.subr.mxu0 0.0
    %1668 = vmatpush1.msra.mxu0 %v1536
    %1669 = vmatprep.subr.mxu0 0.0
    %1670 = vmatpush1.msra.mxu0 %v1535
    %1671 = vmatprep.subr.mxu0 0.0
    %1672 = vmatpush1.msra.mxu0 %v1534
    %1673 = vmatprep.subr.mxu0 0.0
    %1674 = vmatpush1.msra.mxu0 %v1533
    %1675 = vmatprep.subr.mxu0 0.0
    %1676 = vmatpush1.msra.mxu0 %v1532
    %1677 = vmatprep.subr.mxu0 0.0
    %1678 = vmatpush1.msra.mxu0 %v1531
    %1679 = vmatprep.subr.mxu0 0.0
    %1680 = vmatpush1.msra.mxu0 %v1530
    %1681 = vmatprep.subr.mxu0 0.0
    %1682 = vmatpush1.msra.mxu0 %v1529
    %1683 = vmatprep.subr.mxu0 0.0
    %1684 = vmatpush1.msra.mxu0 %v1528
    %1685 = vmatprep.subr.mxu0 0.0
    %1686 = vmatpush1.msra.mxu0 %v1527
    %1687 = vmatprep.subr.mxu0 0.0
    %1688 = vmatpush1.msra.mxu0 %v1526
    %1689 = vmatprep.subr.mxu0 0.0
    %1690 = vmatpush1.msra.mxu0 %v1525
    %1691 = vmatprep.subr.mxu0 0.0
    %1692 = vmatpush1.msra.mxu0 %v1524
    %1693 = vmatprep.subr.mxu0 0.0
    %1694 = vmatpush1.msra.mxu0 %v1523
    %1695 = vmatprep.subr.mxu0 0.0
    %1696 = vmatpush2.msra.mxu0 %v1554
    %1697 = vmatprep.subr.mxu0 0.0
    %1698 = vmatpush2.msra.mxu0 %v1553
    %1699 = vmatprep.subr.mxu0 0.0
    %1700 = vmatpush2.msra.mxu0 %v1552
    %1701 = vmatprep.subr.mxu0 0.0
    %1702 = vmatpush2.msra.mxu0 %v1551
    %1703 = vmatprep.subr.mxu0 0.0
    %1704 = vmatpush2.msra.mxu0 %v1550
    %1705 = vmatprep.subr.mxu0 0.0
    %1706 = vmatpush2.msra.mxu0 %v1549
    %1707 = vmatprep.subr.mxu0 0.0
    %1708 = vmatpush2.msra.mxu0 %v1548
    %1709 = vmatprep.subr.mxu0 0.0
    %1710 = vmatpush2.msra.mxu0 %v1547
    %1711 = vmatprep.subr.mxu0 0.0
    %1712 = vmatpush2.msra.mxu0 %v1546
    %1713 = vmatprep.subr.mxu0 0.0
    %1714 = vmatpush2.msra.mxu0 %v1545
    %1715 = vmatprep.subr.mxu0 0.0
    %1716 = vmatpush2.msra.mxu0 %v1544
    %1717 = vmatprep.subr.mxu0 0.0
    %1718 = vmatpush2.msra.mxu0 %v1543
    %1719 = vmatprep.subr.mxu0 0.0
    %1720 = vmatpush2.msra.mxu0 %v1542
    %1721 = vmatprep.subr.mxu0 0.0
    %1722 = vmatpush2.msra.mxu0 %v1541
    %1723 = vmatprep.subr.mxu0 0.0
    %1724 = vmatpush2.msra.mxu0 %v1540
    %1725 = vmatprep.subr.mxu0 0.0
    %1726 = vmatpush2.msra.mxu0 %v1539
    %1727 = vmatprep.mubr.f32.mxu0 %v1522
    %1728 = vmatmul.mubr.f32.gmra.mxu0 %v1521
    %v1729 = vpop.f32.mrf.mxu0
    %v1730 = vadd.f32 %v1660, %v1729
    %v1731 = vpop.f32.mrf.mxu0
    %1732 = vdwg.mxu0
    %v1733 = vlaneseq
    %v1734 = vshrl.u32 %v1733, 7
    %v1735 = vsub.s32 2, %v1734
    %v1736 = vrot.slane %v65, %v1735
    %v1738 = vadd.f32 %v1730, %v1736
    %vm1739 = vcmask 57344
    %1740 = vst.msk [vmem:[#allocation8] sm:$0x1] %vm1739, %v1738
    // Predicated region
    $region38: #{cnn_forward.1} parent=1 // pred_check
      _
    $region39: #{cnn_forward.1} parent=1 // pred_check_branch
      %1742 = sbr.rel (0) target = $region41
    $region40: #{cnn_forward.1} parent=1 // pred_region
      %s1744 = ssub.s32 16, 16
      %1745 = vsyncadd [#allocation4], %s1744
      %s1747 = sshll.u32 [#allocation8], 4
      %s1748 = int_to_ptr.vmem [resolvable:$true] %s1747
      %1750 = dma.vmem_to_hbm [thread:$0]  %s1748, 16, %s6, [#allocation4]
    $region41: #{cnn_forward.1} parent=1 // pred_fallthru
      _
    // Predicated region
    $region42: #{cnn_forward.1} parent=1 // pred_check
      _
    $region43: #{cnn_forward.1} parent=1 // pred_check_branch
      %1752 = sbr.rel (0) target = $region45
    $region44: #{cnn_forward.1} parent=1 // pred_region
      %1753 = dma.done [#allocation4], 16
    $region45: #{cnn_forward.1} parent=1 // pred_fallthru
      _
    %1754 = vsyncpa [#allocation3], 1
    %1755 = vsyncpa [#allocation6], 1
    %1756 = vsyncpa [#allocation4], 1

</llo_original>
